<compile_context>
chip_gen: v7x
topology: tpu7x:2x2x1
jax: 0.10.0
libtpu: 0.0.40
codegen_flags: <defaults>
</compile_context>

<pallas_src>
import functools

import jax
import jax.numpy as jnp
from jax import lax
from jax.experimental import pallas as pl
from jax.experimental.pallas import tpu as pltpu


# ----------------------------------------------------------------------------
# Kernels
# ----------------------------------------------------------------------------
def conv_pool_kernel(x_ref, w1_ref, b1_ref, w2_ref, b2_ref, w3_ref, b3_ref,
                     g_ref, *, tile_n, chunks_per_split, n_valid, needs_mask):
    """Shared MLP (three folded 1x1 convs, bf16 MXU) + running max-pool.

    Block shapes:
      x_ref : (1, nfeat, tile_n)    bf16, points on the lane axis
      wK_ref: (cK, cK-1)            bf16 folded (BN-scaled) conv weights
      bK_ref: (cK, 1)               f32 folded biases, broadcast over lanes
      g_ref : (1, 1, 1, c3)         f32 per-(batch, split) pooled accumulator
    """
    x = x_ref[0]                                                   # (nfeat, tile_n)

    h = jnp.dot(w1_ref[...], x, preferred_element_type=jnp.float32) + b1_ref[...]
    h = jnp.maximum(h, 0.0).astype(jnp.bfloat16)                   # (c1, tile_n)
    h = jnp.dot(w2_ref[...], h, preferred_element_type=jnp.float32) + b2_ref[...]
    h = jnp.maximum(h, 0.0).astype(jnp.bfloat16)                   # (c2, tile_n)
    h = jnp.dot(w3_ref[...], h, preferred_element_type=jnp.float32) + b3_ref[...]
    h = jnp.maximum(h, 0.0)                                        # (c3, tile_n) f32

    s = pl.program_id(1)            # split index (partial-reduction half)
    c = pl.program_id(2)            # chunk index within the split

    @pl.when(c == 0)
    def _init():
        # 0 is a safe identity for the max because h is post-ReLU (>= 0).
        g_ref[...] = jnp.zeros_like(g_ref)

    def update(hv):
        g_ref[...] = jnp.maximum(g_ref[...],
                                 jnp.max(hv, axis=1)[None, None, None, :])

    if needs_mask:
        chunk_start = (s * chunks_per_split + c) * tile_n
        touches_pad = chunk_start > (n_valid - tile_n)

        @pl.when(touches_pad)
        def _masked():
            col = chunk_start + lax.broadcasted_iota(jnp.int32, (1, tile_n), 1)
            update(jnp.where(col < n_valid, h, 0.0))

        @pl.when(jnp.logical_not(touches_pad))
        def _plain():
            update(h)
    else:
        update(h)


def head_kernel(g_ref, wf1_ref, bf1_ref, wf2_ref, bf2_ref, wf3_ref, bf3_ref,
                out_ref):
    """Batched FC head: all B pooled vectors through the MLP head at once.

    The last FC's output dim is pre-padded to a multiple of 128 in the wrapper
    so the final store is lane-dense (no masked vst).
    """
    g = g_ref[...]                                                 # (B, c3)
    f = jnp.maximum(
        jnp.dot(g, wf1_ref[...], preferred_element_type=jnp.float32)
        + bf1_ref[...], 0.0)                                       # (B, f1)
    f = jnp.maximum(
        jnp.dot(f, wf2_ref[...], preferred_element_type=jnp.float32)
        + bf2_ref[...], 0.0)                                       # (B, f2)
    out_ref[...] = (jnp.dot(f, wf3_ref[...], preferred_element_type=jnp.float32)
                    + bf3_ref[...])                                # (B, nsq_pad)


# ----------------------------------------------------------------------------
# Parameters (BN folded into weights/biases; conv weights stored in bf16)
# ----------------------------------------------------------------------------
def make_params(nfeat, c1, c2, c3, f1, f2, eps=1e-5):
    key = jax.random.PRNGKey(0)
    ks = iter(jax.random.split(key, 64))

    def normal(shape, std=0.1):
        return (std * jax.random.normal(next(ks), shape)).astype(jnp.float32)

    def bn(c):
        gamma = 1.0 + 0.05 * jax.random.normal(next(ks), (c,))
        beta = 0.05 * jax.random.normal(next(ks), (c,))
        rm = 0.05 * jax.random.normal(next(ks), (c,))
        rv = 0.9 + 0.1 * jax.nn.sigmoid(jax.random.normal(next(ks), (c,)))
        return gamma, beta, rm, rv

    def fold(w, cb, gamma, beta, rm, rv):
        # y = (w@x + cb - rm) * gamma/sqrt(rv+eps) + beta  ==  (w*s)@x + b_folded
        s = gamma / jnp.sqrt(rv + eps)
        return w * s[:, None], cb * s + beta - rm * s

    p = {}
    # 1x1 convs, (Cout, Cin) layout; weights bf16 for the MXU, biases f32.
    for name, (cin, cout) in [("1", (nfeat, c1)), ("2", (c1, c2)), ("3", (c2, c3))]:
        wf, bf = fold(normal((cout, cin)), normal((cout,)), *bn(cout))
        p["w" + name] = wf.astype(jnp.bfloat16)                    # (Cout, Cin)
        p["b" + name] = bf.astype(jnp.float32)[:, None]            # (Cout, 1)

    # FC head linears with BN, (Cin, Cout) layout, kept f32 (tiny).
    for name, (cin, cout) in [("f1", (c3, f1)), ("f2", (f1, f2))]:
        wf, bf = fold(normal((cout, cin)), normal((cout,)), *bn(cout))
        p["w" + name] = jnp.transpose(wf).astype(jnp.float32)      # (Cin, Cout)
        p["b" + name] = bf.astype(jnp.float32)[None, :]            # (1, Cout)

    # Final linear: bias initialised to the flattened identity (PointNet trick).
    w = normal((nfeat * nfeat, f2), std=0.01)
    p["wf3"] = jnp.transpose(w).astype(jnp.float32)                # (f2, nfeat^2)
    p["bf3"] = jnp.eye(nfeat, dtype=jnp.float32).reshape(1, -1)    # (1, nfeat^2)
    return p


# ----------------------------------------------------------------------------
# Forward pass
# ----------------------------------------------------------------------------
def tnet_forward(x, p, *, max_tile_n=2048):
    """x: (B, nfeat, N_points) float32 — PyTorch Conv1d (N, C, L) layout."""
    B, nfeat, n_pts = x.shape
    c3 = p["w3"].shape[0]
    nsq = p["wf3"].shape[1]

    # ---- point tiling -------------------------------------------------------
    if n_pts <= max_tile_n:
        tile_n = n_pts
        n_chunks_total = 1
    else:
        tile_n = max_tile_n                    # multiple of 128 by construction
        n_chunks_total = pl.cdiv(n_pts, tile_n)

    # Split the chunk axis into 2 parallel partial reductions when B alone
    # can't occupy both v7x TensorCores (B odd / B == 1).
    n_splits = 2 if (B % 2 == 1 and n_chunks_total >= 2) else 1
    cps = pl.cdiv(n_chunks_total, n_splits)    # chunks per split
    n_padded = n_splits * cps * tile_n
    needs_mask = (n_padded != n_pts)

    x = x.astype(jnp.bfloat16)
    if needs_mask:
        x = jnp.pad(x, ((0, 0), (0, 0), (0, n_padded - n_pts)))

    conv_params = [p["w1"], p["b1"], p["w2"], p["b2"], p["w3"], p["b3"]]

    def wspec(a):
        nd = a.ndim
        return pl.BlockSpec(a.shape, lambda b, s, c, _nd=nd: (0,) * _nd)

    conv_kernel = functools.partial(
        conv_pool_kernel, tile_n=tile_n, chunks_per_split=cps,
        n_valid=n_pts, needs_mask=needs_mask)

    # ---- stage 1: shared MLP + per-(batch, split) max pool ------------------
    g = pl.pallas_call(
        conv_kernel,
        out_shape=jax.ShapeDtypeStruct((B, n_splits, 1, c3), jnp.float32),
        grid=(B, n_splits, cps),
        in_specs=[pl.BlockSpec((1, nfeat, tile_n),
                               lambda b, s, c: (b, 0, s * cps + c))]
                 + [wspec(a) for a in conv_params],
        out_specs=pl.BlockSpec((1, 1, 1, c3), lambda b, s, c: (b, s, 0, 0)),
        compiler_params=pltpu.CompilerParams(
            dimension_semantics=("parallel", "parallel", "arbitrary"),
            vmem_limit_bytes=32 * 1024 * 1024),
    )(x, *conv_params)

    # Combine partial maxes (identity when n_splits == 1); post-ReLU so >= 0.
    g = jnp.max(g.reshape(B, n_splits, c3), axis=1)                # (B, c3)

    # ---- stage 2: FC head ----------------------------------------------------
    if B < 8:
        # A separate kernel launch + HBM round-trip dominates at tiny B; run
        # the few-hundred-FLOP head in plain XLA (identical math).
        f = jnp.maximum(g @ p["wf1"] + p["bf1"], 0.0)
        f = jnp.maximum(f @ p["wf2"] + p["bf2"], 0.0)
        out = f @ p["wf3"] + p["bf3"]
        return out.reshape(B, nfeat, nfeat)

    # Batched Pallas head; pad the output lane dim to 128 for unmasked stores.
    nsq_pad = pl.cdiv(nsq, 128) * 128
    wf3p = jnp.pad(p["wf3"], ((0, 0), (0, nsq_pad - nsq)))
    bf3p = jnp.pad(p["bf3"], ((0, 0), (0, nsq_pad - nsq)))
    head_params = [p["wf1"], p["bf1"], p["wf2"], p["bf2"], wf3p, bf3p]

    def hspec(a):
        nd = a.ndim
        return pl.BlockSpec(a.shape, lambda i, _nd=nd: (0,) * _nd)

    out = pl.pallas_call(
        head_kernel,
        out_shape=jax.ShapeDtypeStruct((B, nsq_pad), jnp.float32),
        grid=(1,),
        in_specs=[hspec(g)] + [hspec(a) for a in head_params],
        out_specs=pl.BlockSpec((B, nsq_pad), lambda i: (0, 0)),
        compiler_params=pltpu.CompilerParams(
            dimension_semantics=("arbitrary",)),
    )(g, *head_params)

    return out[:, :nsq].reshape(B, nfeat, nfeat)


# ----------------------------------------------------------------------------
# Pure-JAX reference (same folded math, same bf16 casts) for correctness
# ----------------------------------------------------------------------------
def tnet_reference(x, p):
    B, nfeat, _ = x.shape
    xT = jnp.transpose(x.astype(jnp.bfloat16), (0, 2, 1))          # (B, N, nfeat)

    def conv_layer(h, w, b):
        y = jnp.dot(h, jnp.transpose(w),
                    preferred_element_type=jnp.float32) + b[:, 0]
        return jnp.maximum(y, 0.0)

    h = conv_layer(xT, p["w1"], p["b1"]).astype(jnp.bfloat16)
    h = conv_layer(h, p["w2"], p["b2"]).astype(jnp.bfloat16)
    h = conv_layer(h, p["w3"], p["b3"])                            # f32
    g = jnp.max(h, axis=1)                                         # (B, c3)
    f = jnp.maximum(g @ p["wf1"] + p["bf1"][0], 0.0)
    f = jnp.maximum(f @ p["wf2"] + p["bf2"][0], 0.0)
    o = f @ p["wf3"] + p["bf3"][0]
    return o.reshape(B, nfeat, nfeat)


if __name__ == "__main__":
    C1, C2, C3, F1, F2 = 32, 64, 128, 64, 32
    keys = jax.random.split(jax.random.PRNGKey(0), 4)

    def check(out, ref, shape, name):
        assert out.shape == shape, f"bad shape in {name}"
        assert jnp.allclose(out, ref, atol=2e-2, rtol=2e-2), \
            f"mismatch vs JAX reference ({name})"

    # Case 1: small shapes (batch=2, nfeat=4, 16 points) — single chunk, jnp head.
    B, NFEAT, NPTS = 2, 4, 16
    params4 = make_params(NFEAT, C1, C2, C3, F1, F2)
    x = jax.random.normal(keys[0], (B, NFEAT, NPTS), dtype=jnp.float32)
    out = jax.block_until_ready(tnet_forward(x, params4))
    check(out, tnet_reference(x, params4), (B, NFEAT, NFEAT), "small")

    # Case 2: multi-chunk running max + last-chunk-only padding mask
    # (400 pts, tile 256 -> 2 chunks, 112 padded cols, B even -> no split).
    B2, NF2, NPTS2 = 4, 3, 400
    params3 = make_params(NF2, C1, C2, C3, F1, F2)
    x2 = jax.random.normal(keys[1], (B2, NF2, NPTS2), dtype=jnp.float32)
    out2 = jax.block_until_ready(tnet_forward(x2, params3, max_tile_n=256))
    check(out2, tnet_reference(x2, params3), (B2, NF2, NF2), "chunked/padded")

    # Case 3: B=1 -> chunk axis split into 2 parallel partial maxes (v7x dual-TC
    # path), with one partially- and one fully-padded chunk masked at runtime.
    B3, NF3, NPTS3 = 1, 3, 600
    x3 = jax.random.normal(keys[2], (B3, NF3, NPTS3), dtype=jnp.float32)
    out3 = jax.block_until_ready(tnet_forward(x3, params3, max_tile_n=128))
    check(out3, tnet_reference(x3, params3), (B3, NF3, NF3), "split/partial-max")

    # Case 4: larger batch -> batched Pallas FC head with lane-padded output.
    B4, NPTS4 = 16, 256
    x4 = jax.random.normal(keys[3], (B4, NFEAT, NPTS4), dtype=jnp.float32)
    out4 = jax.block_until_ready(tnet_forward(x4, params4))
    check(out4, tnet_reference(x4, params4), (B4, NFEAT, NFEAT), "pallas head")

    print("KERNEL_OK")
</pallas_src>

<mosaic_0001>
module attributes {stable_mosaic.version = 11 : i64} {
  func.func @conv_pool_kernel(%arg0: i32, %arg1: i32, %arg2: i32, %arg3: memref<1x4x16xbf16, #tpu.memory_space<vmem>>, %arg4: memref<32x4xbf16, #tpu.memory_space<vmem>>, %arg5: memref<32x1xf32, #tpu.memory_space<vmem>>, %arg6: memref<64x32xbf16, #tpu.memory_space<vmem>>, %arg7: memref<64x1xf32, #tpu.memory_space<vmem>>, %arg8: memref<128x64xbf16, #tpu.memory_space<vmem>>, %arg9: memref<128x1xf32, #tpu.memory_space<vmem>>, %arg10: memref<1x1x1x128xf32, #tpu.memory_space<vmem>>) attributes {dimension_semantics = [#tpu.dimension_semantics<parallel>, #tpu.dimension_semantics<parallel>, #tpu.dimension_semantics<arbitrary>], iteration_bounds = array<i64: 2, 1, 1>, scalar_prefetch = 0 : i64, scratch_operands = 0 : i64, tpu.core_type = #tpu.core_type<tc>, window_params = [{transform_indices = @transform_0, window_bounds = array<i64: 1, 4, 16>}, {pipeline_mode = #tpu.pipeline_mode<synchronous>, transform_indices = @transform_1, window_bounds = array<i64: 32, 4>}, {pipeline_mode = #tpu.pipeline_mode<synchronous>, transform_indices = @transform_2, window_bounds = array<i64: 32, 1>}, {pipeline_mode = #tpu.pipeline_mode<synchronous>, transform_indices = @transform_3, window_bounds = array<i64: 64, 32>}, {pipeline_mode = #tpu.pipeline_mode<synchronous>, transform_indices = @transform_4, window_bounds = array<i64: 64, 1>}, {pipeline_mode = #tpu.pipeline_mode<synchronous>, transform_indices = @transform_5, window_bounds = array<i64: 128, 64>}, {pipeline_mode = #tpu.pipeline_mode<synchronous>, transform_indices = @transform_6, window_bounds = array<i64: 128, 1>}, {transform_indices = @transform_7, window_bounds = array<i64: 1, 1, 1, 128>}]} {
    %c0 = arith.constant 0 : index
    %c0_0 = arith.constant 0 : index
    %c0_1 = arith.constant 0 : index
    %0 = vector.load %arg3[%c0, %c0_0, %c0_1] : memref<1x4x16xbf16, #tpu.memory_space<vmem>>, vector<1x4x16xbf16>
    %1 = vector.shape_cast %0 : vector<1x4x16xbf16> to vector<4x16xbf16>
    %c0_2 = arith.constant 0 : index
    %c0_3 = arith.constant 0 : index
    %2 = vector.load %arg4[%c0_2, %c0_3] : memref<32x4xbf16, #tpu.memory_space<vmem>>, vector<32x4xbf16>
    %cst = arith.constant dense<0.000000e+00> : vector<32x16xf32>
    %3 = tpu.matmul %2, %1, %cst {dimension_numbers = #tpu.dot_dimension_numbers<[1], [0], [0], [1], [0, 0, 1, 1], [], []>} : vector<32x4xbf16>, vector<4x16xbf16>, vector<32x16xf32> -> vector<32x16xf32>
    %c0_4 = arith.constant 0 : index
    %c0_5 = arith.constant 0 : index
    %4 = vector.load %arg5[%c0_4, %c0_5] : memref<32x1xf32, #tpu.memory_space<vmem>>, vector<32x1xf32>
    %5 = vector.broadcast %4 : vector<32x1xf32> to vector<32x16xf32>
    %6 = arith.addf %3, %5 : vector<32x16xf32>
    %cst_6 = arith.constant 0.000000e+00 : f32
    %7 = vector.broadcast %cst_6 : f32 to vector<32x16xf32>
    %8 = arith.maximumf %6, %7 : vector<32x16xf32>
    %9 = arith.truncf %8 : vector<32x16xf32> to vector<32x16xbf16>
    %c0_7 = arith.constant 0 : index
    %c0_8 = arith.constant 0 : index
    %10 = vector.load %arg6[%c0_7, %c0_8] : memref<64x32xbf16, #tpu.memory_space<vmem>>, vector<64x32xbf16>
    %cst_9 = arith.constant dense<0.000000e+00> : vector<64x16xf32>
    %11 = tpu.matmul %10, %9, %cst_9 {dimension_numbers = #tpu.dot_dimension_numbers<[1], [0], [0], [1], [0, 0, 1, 1], [], []>} : vector<64x32xbf16>, vector<32x16xbf16>, vector<64x16xf32> -> vector<64x16xf32>
    %c0_10 = arith.constant 0 : index
    %c0_11 = arith.constant 0 : index
    %12 = vector.load %arg7[%c0_10, %c0_11] : memref<64x1xf32, #tpu.memory_space<vmem>>, vector<64x1xf32>
    %13 = vector.broadcast %12 : vector<64x1xf32> to vector<64x16xf32>
    %14 = arith.addf %11, %13 : vector<64x16xf32>
    %cst_12 = arith.constant 0.000000e+00 : f32
    %15 = vector.broadcast %cst_12 : f32 to vector<64x16xf32>
    %16 = arith.maximumf %14, %15 : vector<64x16xf32>
    %17 = arith.truncf %16 : vector<64x16xf32> to vector<64x16xbf16>
    %c0_13 = arith.constant 0 : index
    %c0_14 = arith.constant 0 : index
    %18 = vector.load %arg8[%c0_13, %c0_14] : memref<128x64xbf16, #tpu.memory_space<vmem>>, vector<128x64xbf16>
    %cst_15 = arith.constant dense<0.000000e+00> : vector<128x16xf32>
    %19 = tpu.matmul %18, %17, %cst_15 {dimension_numbers = #tpu.dot_dimension_numbers<[1], [0], [0], [1], [0, 0, 1, 1], [], []>} : vector<128x64xbf16>, vector<64x16xbf16>, vector<128x16xf32> -> vector<128x16xf32>
    %c0_16 = arith.constant 0 : index
    %c0_17 = arith.constant 0 : index
    %20 = vector.load %arg9[%c0_16, %c0_17] : memref<128x1xf32, #tpu.memory_space<vmem>>, vector<128x1xf32>
    %21 = vector.broadcast %20 : vector<128x1xf32> to vector<128x16xf32>
    %22 = arith.addf %19, %21 : vector<128x16xf32>
    %cst_18 = arith.constant 0.000000e+00 : f32
    %23 = vector.broadcast %cst_18 : f32 to vector<128x16xf32>
    %24 = arith.maximumf %22, %23 : vector<128x16xf32>
    %c0_i32 = arith.constant 0 : i32
    %25 = arith.cmpi eq, %arg2, %c0_i32 : i32
    %26 = arith.extui %25 : i1 to i32
    %c0_i32_19 = arith.constant 0 : i32
    %27 = arith.cmpi ne, %26, %c0_i32_19 : i32
    scf.if %27 {
      %cst_29 = arith.constant 0.000000e+00 : f32
      %33 = vector.broadcast %cst_29 : f32 to vector<1x1x1x128xf32>
      %c0_30 = arith.constant 0 : index
      %c0_31 = arith.constant 0 : index
      %c0_32 = arith.constant 0 : index
      %c0_33 = arith.constant 0 : index
      %34 = vector.load %arg10[%c0_30, %c0_31, %c0_32, %c0_33] : memref<1x1x1x128xf32, #tpu.memory_space<vmem>>, vector<1x1x1x128xf32>
      tpu.vector_store %arg10[%c0_30, %c0_31, %c0_32, %c0_33], %33 {strides = array<i32>} : memref<1x1x1x128xf32, #tpu.memory_space<vmem>>, vector<1x1x1x128xf32>,
    } else {
    }
    %c0_20 = arith.constant 0 : index
    %c0_21 = arith.constant 0 : index
    %c0_22 = arith.constant 0 : index
    %c0_23 = arith.constant 0 : index
    %28 = vector.load %arg10[%c0_20, %c0_21, %c0_22, %c0_23] : memref<1x1x1x128xf32, #tpu.memory_space<vmem>>, vector<1x1x1x128xf32>
    %cst_24 = arith.constant dense<0xFF800000> : vector<128xf32>
    %29 = vector.multi_reduction <maximumf>, %24, %cst_24 [1] : vector<128x16xf32> to vector<128xf32>
    %30 = vector.shape_cast %29 : vector<128xf32> to vector<1x1x1x128xf32>
    %31 = arith.maximumf %28, %30 : vector<1x1x1x128xf32>
    %c0_25 = arith.constant 0 : index
    %c0_26 = arith.constant 0 : index
    %c0_27 = arith.constant 0 : index
    %c0_28 = arith.constant 0 : index
    %32 = vector.load %arg10[%c0_25, %c0_26, %c0_27, %c0_28] : memref<1x1x1x128xf32, #tpu.memory_space<vmem>>, vector<1x1x1x128xf32>
    tpu.vector_store %arg10[%c0_25, %c0_26, %c0_27, %c0_28], %31 {strides = array<i32>} : memref<1x1x1x128xf32, #tpu.memory_space<vmem>>, vector<1x1x1x128xf32>,
    return
  }
  func.func @transform_0(%arg0: i32, %arg1: i32, %arg2: i32) -> (i32, i32, i32) {
    %c1_i32 = arith.constant 1 : i32
    %0 = arith.muli %arg1, %c1_i32 : i32
    %1 = arith.addi %0, %arg2 : i32
    %c0_i32 = arith.constant 0 : i32
    %c0_i32_0 = arith.constant 0 : i32
    return %arg0, %c0_i32, %1 : i32, i32, i32
  }
  func.func @transform_1(%arg0: i32, %arg1: i32, %arg2: i32) -> (i32, i32) {
    %c0_i32 = arith.constant 0 : i32
    %c0_i32_0 = arith.constant 0 : i32
    %c0_i32_1 = arith.constant 0 : i32
    return %c0_i32, %c0_i32_0 : i32, i32
  }
  func.func @transform_2(%arg0: i32, %arg1: i32, %arg2: i32) -> (i32, i32) {
    %c0_i32 = arith.constant 0 : i32
    %c0_i32_0 = arith.constant 0 : i32
    %c0_i32_1 = arith.constant 0 : i32
    return %c0_i32, %c0_i32_0 : i32, i32
  }
  func.func @transform_3(%arg0: i32, %arg1: i32, %arg2: i32) -> (i32, i32) {
    %c0_i32 = arith.constant 0 : i32
    %c0_i32_0 = arith.constant 0 : i32
    %c0_i32_1 = arith.constant 0 : i32
    return %c0_i32, %c0_i32_0 : i32, i32
  }
  func.func @transform_4(%arg0: i32, %arg1: i32, %arg2: i32) -> (i32, i32) {
    %c0_i32 = arith.constant 0 : i32
    %c0_i32_0 = arith.constant 0 : i32
    %c0_i32_1 = arith.constant 0 : i32
    return %c0_i32, %c0_i32_0 : i32, i32
  }
  func.func @transform_5(%arg0: i32, %arg1: i32, %arg2: i32) -> (i32, i32) {
    %c0_i32 = arith.constant 0 : i32
    %c0_i32_0 = arith.constant 0 : i32
    %c0_i32_1 = arith.constant 0 : i32
    return %c0_i32, %c0_i32_0 : i32, i32
  }
  func.func @transform_6(%arg0: i32, %arg1: i32, %arg2: i32) -> (i32, i32) {
    %c0_i32 = arith.constant 0 : i32
    %c0_i32_0 = arith.constant 0 : i32
    %c0_i32_1 = arith.constant 0 : i32
    return %c0_i32, %c0_i32_0 : i32, i32
  }
  func.func @transform_7(%arg0: i32, %arg1: i32, %arg2: i32) -> (i32, i32, i32, i32) {
    %c0_i32 = arith.constant 0 : i32
    %c0_i32_0 = arith.constant 0 : i32
    %c0_i32_1 = arith.constant 0 : i32
    return %arg0, %arg1, %c0_i32, %c0_i32_0 : i32, i32, i32, i32
  }
}

</mosaic_0001>

<llo_original>
// kernel: tpu_custom_call.1
$region0: #{tpu_custom_call.1}
  #allocation0 [shape = 'u32[]', space=smem, size = 0x4, offset = 0x4, fixed_abs, tag = 'smem constant byte address 0x4 - core index']
  #allocation1 [shape = 'u32[144,128]{1,0:T(1,128)}', space=vmem, size = 0x12000, scoped, tag = 'internal scratch']
  %s0 = inlined_call_operand.vmem [shape: bf16[2,4,16], index: 0, kind: input, shape index: {}]
  %s1 = inlined_call_operand.vmem [shape: bf16[32,4], index: 1, kind: input, shape index: {}]
  %s2 = inlined_call_operand.vmem [shape: f32[32,1], index: 2, kind: input, shape index: {}]
  %s3 = inlined_call_operand.vmem [shape: bf16[64,32], index: 3, kind: input, shape index: {}]
  %s4 = inlined_call_operand.vmem [shape: f32[64,1], index: 4, kind: input, shape index: {}]
  %s5 = inlined_call_operand.vmem [shape: bf16[128,64], index: 5, kind: input, shape index: {}]
  %s6 = inlined_call_operand.vmem [shape: f32[128,1], index: 6, kind: input, shape index: {}]
  %s7 = inlined_call_operand.hbm [shape: f32[2,1,1,128], index: 7, kind: output, shape index: {}]
  %s8 = sld [smem:[#allocation0]]
  $region65: #{tpu_custom_call.1} parent=0
    _
  %s10 = ssub.s32 1, %s8
  %s11 = scalar_select 0, %s10, %s8
  $region1: #{tpu_custom_call.1} parent=0
    #allocation2 [shape = 'u8[1024]{0}', space=vmem, size = 0x400, scoped, tag = 'output window, operand 0']
    #allocation3 [shape = 's32[2]{0}', space=sflag, size = 0x8, scoped, tag = 'scoped memory for tpu_custom_call.1']
    %12 = vsyncpa [#allocation3], 0
    %s13 = scalar_lea.sflag [#allocation3], 1
    %14 = vsyncpa %s13, 0
    loop: start=0, step=1, limit=4
    $region2: #{tpu_custom_call.1} parent=1 // loop_pre_header
      _
    $region3: #{tpu_custom_call.1} parent=1 // loop_header
      %s16 = sphi 0, %s20
      %p17 = scmp.ge.s32.totalorder %s16, 4
      %s23 = sphi 0, %s42
      %s24 = sphi 0, %s38
      %s25 = sphi 0, %s34
      %s26 = sphi 0, %s23
      %s27 = sphi 0, %s24
      %s28 = sphi 0, %s25
      %s29 = sphi 0, %s26
      %s30 = sphi 0, %s27
      %s31 = sphi 0, %s28
      %s49 = sphi 0, %s51
      %s52 = sphi 0, %s49
      %s53 = sphi 0, %s52
      %s69 = sphi 0, %s53
      %s73 = sphi 0, %s73
      %s75 = sphi 0, %s73
      %s76 = sphi 0, %s75
      %s90 = sphi 0, %s76
      %s94 = sphi 0, %s94
      %s96 = sphi 0, %s94
      %s97 = sphi 0, %s96
      %s111 = sphi 0, %s97
      %s115 = sphi 0, %s115
      %s117 = sphi 0, %s115
      %s118 = sphi 0, %s117
      %s132 = sphi 0, %s118
      %s136 = sphi 0, %s136
      %s138 = sphi 0, %s136
      %s139 = sphi 0, %s138
      %s153 = sphi 0, %s139
      %s157 = sphi 0, %s157
      %s159 = sphi 0, %s157
      %s160 = sphi 0, %s159
      %s174 = sphi 0, %s160
      %s178 = sphi 0, %s178
      %s180 = sphi 0, %s178
      %s181 = sphi 0, %s180
      %s195 = sphi 0, %s181
      %s203 = sphi 0, %s205
      %s206 = sphi 0, %s203
      %s207 = sphi 0, %s206
      %s223 = sphi 0, %s207
    $region4: #{tpu_custom_call.1} parent=1 // loop_header_branch
      %19 = sbr.rel (%p17) target = $region8
    $region5: #{tpu_custom_call.1} parent=1 // loop_body
      %s21 = ssub.s32 %s16, 1
      %s22 = ssub.s32 %s16, 2
      %s32 = sadd.s32 1, %s25
      %p33 = scmp.ge.s32.totalorder %s32, 1
      %s34 = scalar_select %p33, 0, %s32
      %s35 = sadd.s32 1, %s24
      %s36 = scalar_select %p33, %s35, %s24
      %p37 = scmp.ge.s32.totalorder %s36, 1
      %s38 = scalar_select %p37, 0, %s36
      %s39 = sadd.s32 1, %s23
      %s40 = scalar_select %p37, %s39, %s23
      %p41 = scmp.ge.s32.totalorder %s40, 2
      %s42 = scalar_select %p41, 0, %s40
      %s43 = sadd.s32 %s24, %s25
      %s44 = sadd.s32 %s38, %s34
      %s45 = ssub.s32 %s23, %s42
      %s46 = ssub.s32 %s43, %s44
      %s47 = sor.u32 %s45, %s46
      %p48 = scmp.eq.s32.totalorder %s47, 0
      %s50 = sadd.s32 %s49, 1
      %s51 = scalar_select %p48, %s49, %s50
      %p54 = pneg %p48
      %p55 = scmp.eq.s32.totalorder %s16, 1
      %p56 = por %p54, %p55
      %p57 = scmp.ne.s32.totalorder %s49, %s52
      %p58 = scmp.eq.s32.totalorder %s16, 0
      %p59 = por %p57, %p58
      %p60 = scmp.ne.s32.totalorder %s49, %s52
      %p61 = scmp.eq.s32.totalorder %s21, 1
      %p62 = por %p60, %p61
      %p63 = scmp.ne.s32.totalorder %s52, %s53
      %p64 = scmp.eq.s32.totalorder %s21, 0
      %p65 = por %p63, %p64
      %p66 = scmp.ne.s32.totalorder %s52, %s53
      %p67 = scmp.eq.s32.totalorder %s22, 1
      %p68 = por %p66, %p67
      %p70 = scmp.ne.s32.totalorder %s53, %s69
      %p71 = scmp.eq.s32.totalorder %s22, 0
      %p72 = por %p70, %p71
      %s74 = sadd.s32 %s73, 1
      %p77 = scmp.eq.s32.totalorder %s16, 1
      %p78 = scmp.ne.s32.totalorder %s73, %s75
      %p79 = scmp.eq.s32.totalorder %s16, 0
      %p80 = por %p78, %p79
      %p81 = scmp.ne.s32.totalorder %s73, %s75
      %p82 = scmp.eq.s32.totalorder %s21, 1
      %p83 = por %p81, %p82
      %p84 = scmp.ne.s32.totalorder %s75, %s76
      %p85 = scmp.eq.s32.totalorder %s21, 0
      %p86 = por %p84, %p85
      %p87 = scmp.ne.s32.totalorder %s75, %s76
      %p88 = scmp.eq.s32.totalorder %s22, 1
      %p89 = por %p87, %p88
      %p91 = scmp.ne.s32.totalorder %s76, %s90
      %p92 = scmp.eq.s32.totalorder %s22, 0
      %p93 = por %p91, %p92
      %s95 = sadd.s32 %s94, 1
      %p98 = scmp.eq.s32.totalorder %s16, 1
      %p99 = scmp.ne.s32.totalorder %s94, %s96
      %p100 = scmp.eq.s32.totalorder %s16, 0
      %p101 = por %p99, %p100
      %p102 = scmp.ne.s32.totalorder %s94, %s96
      %p103 = scmp.eq.s32.totalorder %s21, 1
      %p104 = por %p102, %p103
      %p105 = scmp.ne.s32.totalorder %s96, %s97
      %p106 = scmp.eq.s32.totalorder %s21, 0
      %p107 = por %p105, %p106
      %p108 = scmp.ne.s32.totalorder %s96, %s97
      %p109 = scmp.eq.s32.totalorder %s22, 1
      %p110 = por %p108, %p109
      %p112 = scmp.ne.s32.totalorder %s97, %s111
      %p113 = scmp.eq.s32.totalorder %s22, 0
      %p114 = por %p112, %p113
      %s116 = sadd.s32 %s115, 1
      %p119 = scmp.eq.s32.totalorder %s16, 1
      %p120 = scmp.ne.s32.totalorder %s115, %s117
      %p121 = scmp.eq.s32.totalorder %s16, 0
      %p122 = por %p120, %p121
      %p123 = scmp.ne.s32.totalorder %s115, %s117
      %p124 = scmp.eq.s32.totalorder %s21, 1
      %p125 = por %p123, %p124
      %p126 = scmp.ne.s32.totalorder %s117, %s118
      %p127 = scmp.eq.s32.totalorder %s21, 0
      %p128 = por %p126, %p127
      %p129 = scmp.ne.s32.totalorder %s117, %s118
      %p130 = scmp.eq.s32.totalorder %s22, 1
      %p131 = por %p129, %p130
      %p133 = scmp.ne.s32.totalorder %s118, %s132
      %p134 = scmp.eq.s32.totalorder %s22, 0
      %p135 = por %p133, %p134
      %s137 = sadd.s32 %s136, 1
      %p140 = scmp.eq.s32.totalorder %s16, 1
      %p141 = scmp.ne.s32.totalorder %s136, %s138
      %p142 = scmp.eq.s32.totalorder %s16, 0
      %p143 = por %p141, %p142
      %p144 = scmp.ne.s32.totalorder %s136, %s138
      %p145 = scmp.eq.s32.totalorder %s21, 1
      %p146 = por %p144, %p145
      %p147 = scmp.ne.s32.totalorder %s138, %s139
      %p148 = scmp.eq.s32.totalorder %s21, 0
      %p149 = por %p147, %p148
      %p150 = scmp.ne.s32.totalorder %s138, %s139
      %p151 = scmp.eq.s32.totalorder %s22, 1
      %p152 = por %p150, %p151
      %p154 = scmp.ne.s32.totalorder %s139, %s153
      %p155 = scmp.eq.s32.totalorder %s22, 0
      %p156 = por %p154, %p155
      %s158 = sadd.s32 %s157, 1
      %p161 = scmp.eq.s32.totalorder %s16, 1
      %p162 = scmp.ne.s32.totalorder %s157, %s159
      %p163 = scmp.eq.s32.totalorder %s16, 0
      %p164 = por %p162, %p163
      %p165 = scmp.ne.s32.totalorder %s157, %s159
      %p166 = scmp.eq.s32.totalorder %s21, 1
      %p167 = por %p165, %p166
      %p168 = scmp.ne.s32.totalorder %s159, %s160
      %p169 = scmp.eq.s32.totalorder %s21, 0
      %p170 = por %p168, %p169
      %p171 = scmp.ne.s32.totalorder %s159, %s160
      %p172 = scmp.eq.s32.totalorder %s22, 1
      %p173 = por %p171, %p172
      %p175 = scmp.ne.s32.totalorder %s160, %s174
      %p176 = scmp.eq.s32.totalorder %s22, 0
      %p177 = por %p175, %p176
      %s179 = sadd.s32 %s178, 1
      %p182 = scmp.eq.s32.totalorder %s16, 1
      %p183 = scmp.ne.s32.totalorder %s178, %s180
      %p184 = scmp.eq.s32.totalorder %s16, 0
      %p185 = por %p183, %p184
      %p186 = scmp.ne.s32.totalorder %s178, %s180
      %p187 = scmp.eq.s32.totalorder %s21, 1
      %p188 = por %p186, %p187
      %p189 = scmp.ne.s32.totalorder %s180, %s181
      %p190 = scmp.eq.s32.totalorder %s21, 0
      %p191 = por %p189, %p190
      %p192 = scmp.ne.s32.totalorder %s180, %s181
      %p193 = scmp.eq.s32.totalorder %s22, 1
      %p194 = por %p192, %p193
      %p196 = scmp.ne.s32.totalorder %s181, %s195
      %p197 = scmp.eq.s32.totalorder %s22, 0
      %p198 = por %p196, %p197
      %s199 = ssub.s32 %s23, %s42
      %s200 = ssub.s32 %s24, %s38
      %s201 = sor.u32 %s199, %s200
      %p202 = scmp.eq.s32.totalorder %s201, 0
      %s204 = sadd.s32 %s203, 1
      %s205 = scalar_select %p202, %s203, %s204
      %p208 = pneg %p202
      %p209 = scmp.eq.s32.totalorder %s16, 1
      %p210 = por %p208, %p209
      %p211 = scmp.ne.s32.totalorder %s203, %s206
      %p212 = scmp.eq.s32.totalorder %s16, 0
      %p213 = por %p211, %p212
      %p214 = scmp.ne.s32.totalorder %s203, %s206
      %p215 = scmp.eq.s32.totalorder %s21, 1
      %p216 = por %p214, %p215
      %p217 = scmp.ne.s32.totalorder %s206, %s207
      %p218 = scmp.eq.s32.totalorder %s21, 0
      %p219 = por %p217, %p218
      %p220 = scmp.ne.s32.totalorder %s206, %s207
      %p221 = scmp.eq.s32.totalorder %s22, 1
      %p222 = por %p220, %p221
      %p224 = scmp.ne.s32.totalorder %s207, %s223
      %p225 = scmp.eq.s32.totalorder %s22, 0
      %p226 = por %p224, %p225
      %p227 = scmp.le.s32.totalorder 1, %s16
      %p228 = scmp.lt.s32.totalorder %s16, 3
      %p229 = pnand %p227, %p228
      %p230 = pneg %p229
      // Predicated region
      $region9: #{tpu_custom_call.1} parent=5 // pred_check
        _
      $region10: #{tpu_custom_call.1} parent=5 // pred_check_branch
        %232 = sbr.rel (%p229) target = $region12
      $region11: #{tpu_custom_call.1} parent=5 // pred_region
        %s233 = ssub.s32 %s16, 1
        // Predicated region
        $region13: #{tpu_custom_call.1} parent=11 // pred_check
          %p234 = pneg %p86
        $region14: #{tpu_custom_call.1} parent=11 // pred_check_branch
          %236 = sbr.rel (%p234) target = $region16
        $region15: #{tpu_custom_call.1} parent=11 // pred_region
          _
        $region16: #{tpu_custom_call.1} parent=11 // pred_fallthru
          _
        // Predicated region
        $region17: #{tpu_custom_call.1} parent=11 // pred_check
          %p237 = pneg %p107
        $region18: #{tpu_custom_call.1} parent=11 // pred_check_branch
          %239 = sbr.rel (%p237) target = $region20
        $region19: #{tpu_custom_call.1} parent=11 // pred_region
          _
        $region20: #{tpu_custom_call.1} parent=11 // pred_fallthru
          _
        // Predicated region
        $region21: #{tpu_custom_call.1} parent=11 // pred_check
          %p240 = pneg %p128
        $region22: #{tpu_custom_call.1} parent=11 // pred_check_branch
          %242 = sbr.rel (%p240) target = $region24
        $region23: #{tpu_custom_call.1} parent=11 // pred_region
          _
        $region24: #{tpu_custom_call.1} parent=11 // pred_fallthru
          _
        // Predicated region
        $region25: #{tpu_custom_call.1} parent=11 // pred_check
          %p243 = pneg %p149
        $region26: #{tpu_custom_call.1} parent=11 // pred_check_branch
          %245 = sbr.rel (%p243) target = $region28
        $region27: #{tpu_custom_call.1} parent=11 // pred_region
          _
        $region28: #{tpu_custom_call.1} parent=11 // pred_fallthru
          _
        // Predicated region
        $region29: #{tpu_custom_call.1} parent=11 // pred_check
          %p246 = pneg %p170
        $region30: #{tpu_custom_call.1} parent=11 // pred_check_branch
          %248 = sbr.rel (%p246) target = $region32
        $region31: #{tpu_custom_call.1} parent=11 // pred_region
          _
        $region32: #{tpu_custom_call.1} parent=11 // pred_fallthru
          _
        // Predicated region
        $region33: #{tpu_custom_call.1} parent=11 // pred_check
          %p249 = pneg %p191
        $region34: #{tpu_custom_call.1} parent=11 // pred_check_branch
          %251 = sbr.rel (%p249) target = $region36
        $region35: #{tpu_custom_call.1} parent=11 // pred_region
          _
        $region36: #{tpu_custom_call.1} parent=11 // pred_fallthru
          _
      $region12: #{tpu_custom_call.1} parent=5 // pred_fallthru
        _
      %p252 = scmp.lt.s32.totalorder %s16, 2
      // Predicated region
      $region37: #{tpu_custom_call.1} parent=5 // pred_check
        %p253 = pneg %p252
      $region38: #{tpu_custom_call.1} parent=5 // pred_check_branch
        %255 = sbr.rel (%p253) target = $region40
      $region39: #{tpu_custom_call.1} parent=5 // pred_region
        // Predicated region
        $region41: #{tpu_custom_call.1} parent=39 // pred_check
          %p256 = pneg %p59
        $region42: #{tpu_custom_call.1} parent=39 // pred_check_branch
          %258 = sbr.rel (%p256) target = $region44
        $region43: #{tpu_custom_call.1} parent=39 // pred_region
          %s259 = sadd.s32 %s24, %s25
          %p260 = scmp.lt.s32.totalorder %s23, 1
          %s261 = scalar_select %p260, %s23, 1
          %p262 = scmp.lt.s32.totalorder %s259, 0
          %s263 = scalar_select %p262, %s259, 0
          %s264 = sadd.s32 %s263, %s261
          %s265 = smul.addr %s264, 2
          %s266 = scalar_lea.vmem %s0, %s265
          %s267 = sadd.s32 %s24, %s25
        $region44: #{tpu_custom_call.1} parent=39 // pred_fallthru
          _
      $region40: #{tpu_custom_call.1} parent=5 // pred_fallthru
        _
      %p268 = scmp.le.s32.totalorder 1, %s16
      %p269 = scmp.lt.s32.totalorder %s16, 3
      %p270 = pnand %p268, %p269
      %p271 = pneg %p270
      // Predicated region
      $region45: #{tpu_custom_call.1} parent=5 // pred_check
        _
      $region46: #{tpu_custom_call.1} parent=5 // pred_check_branch
        %273 = sbr.rel (%p270) target = $region48
      $region47: #{tpu_custom_call.1} parent=5 // pred_region
        %s274 = ssub.s32 %s16, 1
        %s275 = sadd.s32 %s27, %s28
        %p276 = scmp.lt.s32.totalorder %s26, 1
        %s277 = scalar_select %p276, %s26, 1
        %p278 = scmp.lt.s32.totalorder %s275, 0
        %s279 = scalar_select %p278, %s275, 0
        %s280 = sadd.s32 %s279, %s277
        %s281 = smul.addr %s280, 2
        %s282 = scalar_lea.vmem %s0, %s281
        %p283 = pneg %p65
        %p284 = pneg %p62
        %p285 = pneg %p86
        %p286 = pneg %p83
        %p287 = pneg %p107
        %p288 = pneg %p104
        %p289 = pneg %p128
        %p290 = pneg %p125
        %p291 = pneg %p149
        %p292 = pneg %p146
        %p293 = pneg %p170
        %p294 = pneg %p167
        %p295 = pneg %p191
        %p296 = pneg %p188
        %p297 = pneg %p219
        %p298 = pneg %p216
        %s299 = sand.u32 %s206, 1
        %s300 = scalar_lea.sflag [#allocation3], %s299
        %s301 = sand.u32 %s206, 1
        %s302 = scalar_lea.vmem [#allocation2], %s301
        %s303 = sadd.s32 %s27, %s28
        %p304 = scmp.lt.s32.totalorder %s26, 1
        %s305 = scalar_select %p304, %s26, 1
        %p306 = scmp.lt.s32.totalorder %s303, 0
        %s307 = scalar_select %p306, %s303, 0
        %s308 = sadd.s32 %s307, %s305
        %s309 = smul.addr %s308, 2
        %s310 = scalar_lea.vmem %s0, %s309
        %s311 = sadd.s32 %s27, %s28
        %v313 = vld [vmem:[%s310] sm:$0x3]
        %v314 = vld [vmem:[%s1] sm:$0xf]
        %v315 = vld [vmem:[%s1 + $0x4] sm:$0xf]
        %v316 = vld [vmem:[%s1 + $0x8] sm:$0xf]
        %v317 = vld [vmem:[%s1 + $0xc] sm:$0xf]
        %v318 = vld [vmem:[%s2] sm:$0xff]
        %v319 = vld [vmem:[%s2 + $0x8] sm:$0xff]
        %v320 = vld [vmem:[%s2 + $0x10] sm:$0xff]
        %v321 = vld [vmem:[%s2 + $0x18] sm:$0xff]
        %323 = vset.pattern.permute.xlu0 0
        %324 = vperm.xlu0 %323, %v318
        %v325 = vpop.permute.xlu0 %324
        %328 = vset.pattern.permute.xlu0 0
        %329 = vperm.xlu0 %328, %v319
        %v330 = vpop.permute.xlu0 %329
        %333 = vset.pattern.permute.xlu0 0
        %334 = vperm.xlu0 %333, %v320
        %v335 = vpop.permute.xlu0 %334
        %338 = vset.pattern.permute.xlu0 0
        %339 = vperm.xlu0 %338, %v321
        %v340 = vpop.permute.xlu0 %339
        %v346 = vunpack.c.l.b16 %v314
        %v347 = vunpack.c.l.b16 %v315
        %v348 = vunpack.c.l.b16 %v316
        %v349 = vunpack.c.l.b16 %v317
        %v350 = vpack.c.b16 %v347, %v346
        %v351 = vpack.c.b16 %v349, %v348
        %vm352 = vcmask 31744
        %v354 = vsel %vm352, %v350, 0
        %v357 = vsel %vm352, %v351, 0
        %vm359 = vcmask 1041408
        %v361 = vsel %vm359, %v313, 0
        %363 = vmatprep.subr.bf16.mxu0 0
        %364 = vmatpush1.bf16.msra.mxu0 %v361
        %365 = vmatprep.subr.bf16.mxu0 0
        %366 = vmatpush1.bf16.msra.mxu0 0
        %367 = vmatprep.subr.bf16.mxu0 0
        %368 = vmatpush1.bf16.msra.mxu0 0
        %369 = vmatprep.subr.bf16.mxu0 0
        %370 = vmatpush1.bf16.msra.mxu0 0
        %371 = vmatprep.subr.bf16.mxu0 0
        %372 = vmatpush1.bf16.msra.mxu0 0
        %373 = vmatprep.subr.bf16.mxu0 0
        %374 = vmatpush1.bf16.msra.mxu0 0
        %375 = vmatprep.subr.bf16.mxu0 0
        %376 = vmatpush1.bf16.msra.mxu0 0
        %377 = vmatprep.subr.bf16.mxu0 0
        %378 = vmatpush1.bf16.msra.mxu0 0
        %379 = vmatprep.subr.bf16.mxu0 0
        %380 = vmatpush1.bf16.msra.mxu0 0
        %381 = vmatprep.subr.bf16.mxu0 0
        %382 = vmatpush1.bf16.msra.mxu0 0
        %383 = vmatprep.subr.bf16.mxu0 0
        %384 = vmatpush1.bf16.msra.mxu0 0
        %385 = vmatprep.subr.bf16.mxu0 0
        %386 = vmatpush1.bf16.msra.mxu0 0
        %387 = vmatprep.subr.bf16.mxu0 0
        %388 = vmatpush1.bf16.msra.mxu0 0
        %389 = vmatprep.subr.bf16.mxu0 0
        %390 = vmatpush1.bf16.msra.mxu0 0
        %391 = vmatprep.subr.bf16.mxu0 0
        %392 = vmatpush1.bf16.msra.mxu0 0
        %393 = vmatprep.subr.bf16.mxu0 0
        %394 = vmatpush1.bf16.msra.mxu0 0
        %395 = vmatprep.mubr.bf16.mxu0 0
        %396 = vmatmul.mubr.bf16.gmra.mrb[0].mxu0 %v354
        %v397 = vpop.f32.mrb[0].mxu0
        %v398 = vadd.f32 %v325, %v397
        %v399 = vpop.f32.mrb[0].mxu0
        %v400 = vpop.f32.mrb[0].mxu0
        %v401 = vadd.f32 %v330, %v400
        %v402 = vpop.f32.mrb[0].mxu0
        %403 = vmatprep.mubr.bf16.mxu0 0
        %404 = vmatmul.mubr.bf16.gmra.mrb[0].mxu0 %v357
        %v405 = vpop.f32.mrb[0].mxu0
        %v406 = vadd.f32 %v335, %v405
        %v407 = vpop.f32.mrb[0].mxu0
        %v408 = vpop.f32.mrb[0].mxu0
        %v409 = vadd.f32 %v340, %v408
        %v410 = vpop.f32.mrb[0].mxu0
        %411 = vdwg.mxu0
        %v412 = vmax.f32 %v398, 0.0
        %v413 = vmax.f32 %v401, 0.0
        %v414 = vmax.f32 %v406, 0.0
        %v415 = vmax.f32 %v409, 0.0
        %v416 = vpack.c.bf16 %v413, %v412
        %v417 = vpack.c.bf16 %v415, %v414
        %v418 = vld [vmem:[%s3] sm:$0xf]
        %v419 = vld [vmem:[%s3 + $0x4] sm:$0xf]
        %v420 = vld [vmem:[%s3 + $0x8] sm:$0xf]
        %v421 = vld [vmem:[%s3 + $0xc] sm:$0xf]
        %v422 = vld [vmem:[%s3 + $0x10] sm:$0xf]
        %v423 = vld [vmem:[%s3 + $0x14] sm:$0xf]
        %v424 = vld [vmem:[%s3 + $0x18] sm:$0xf]
        %v425 = vld [vmem:[%s3 + $0x1c] sm:$0xf]
        %v426 = vld [vmem:[%s4] sm:$0xff]
        %v427 = vld [vmem:[%s4 + $0x8] sm:$0xff]
        %v428 = vld [vmem:[%s4 + $0x10] sm:$0xff]
        %v429 = vld [vmem:[%s4 + $0x18] sm:$0xff]
        %v430 = vld [vmem:[%s4 + $0x20] sm:$0xff]
        %v431 = vld [vmem:[%s4 + $0x28] sm:$0xff]
        %v432 = vld [vmem:[%s4 + $0x30] sm:$0xff]
        %v433 = vld [vmem:[%s4 + $0x38] sm:$0xff]
        %435 = vset.pattern.permute.xlu0 0
        %436 = vperm.xlu0 %435, %v426
        %v437 = vpop.permute.xlu0 %436
        %440 = vset.pattern.permute.xlu0 0
        %441 = vperm.xlu0 %440, %v427
        %v442 = vpop.permute.xlu0 %441
        %445 = vset.pattern.permute.xlu0 0
        %446 = vperm.xlu0 %445, %v428
        %v447 = vpop.permute.xlu0 %446
        %450 = vset.pattern.permute.xlu0 0
        %451 = vperm.xlu0 %450, %v429
        %v452 = vpop.permute.xlu0 %451
        %455 = vset.pattern.permute.xlu0 0
        %456 = vperm.xlu0 %455, %v430
        %v457 = vpop.permute.xlu0 %456
        %460 = vset.pattern.permute.xlu0 0
        %461 = vperm.xlu0 %460, %v431
        %v462 = vpop.permute.xlu0 %461
        %465 = vset.pattern.permute.xlu0 0
        %466 = vperm.xlu0 %465, %v432
        %v467 = vpop.permute.xlu0 %466
        %470 = vset.pattern.permute.xlu0 0
        %471 = vperm.xlu0 %470, %v433
        %v472 = vpop.permute.xlu0 %471
        %v482 = vunpack.c.l.b16 %v418
        %v483 = vunpack.c.l.b16 %v419
        %v484 = vunpack.c.l.b16 %v420
        %v485 = vunpack.c.l.b16 %v421
        %v486 = vunpack.c.l.b16 %v422
        %v487 = vunpack.c.l.b16 %v423
        %v488 = vunpack.c.l.b16 %v424
        %v489 = vunpack.c.l.b16 %v425
        %v490 = vpack.c.b16 %v483, %v482
        %v491 = vpack.c.b16 %v485, %v484
        %v492 = vpack.c.b16 %v487, %v486
        %v493 = vpack.c.b16 %v489, %v488
        %vm494 = vcmask 261120
        %v496 = vsel %vm494, %v490, 0
        %v499 = vsel %vm494, %v491, 0
        %v502 = vsel %vm494, %v492, 0
        %v505 = vsel %vm494, %v493, 0
        %507 = vmatprep.subr.bf16.mxu0 0
        %508 = vmatpush1.bf16.msra.mxu0 %v416
        %509 = vmatprep.subr.bf16.mxu0 0
        %510 = vmatpush1.bf16.msra.mxu0 %v417
        %511 = vmatprep.subr.bf16.mxu0 0
        %512 = vmatpush1.bf16.msra.mxu0 0
        %513 = vmatprep.subr.bf16.mxu0 0
        %514 = vmatpush1.bf16.msra.mxu0 0
        %515 = vmatprep.subr.bf16.mxu0 0
        %516 = vmatpush1.bf16.msra.mxu0 0
        %517 = vmatprep.subr.bf16.mxu0 0
        %518 = vmatpush1.bf16.msra.mxu0 0
        %519 = vmatprep.subr.bf16.mxu0 0
        %520 = vmatpush1.bf16.msra.mxu0 0
        %521 = vmatprep.subr.bf16.mxu0 0
        %522 = vmatpush1.bf16.msra.mxu0 0
        %523 = vmatprep.subr.bf16.mxu0 0
        %524 = vmatpush1.bf16.msra.mxu0 0
        %525 = vmatprep.subr.bf16.mxu0 0
        %526 = vmatpush1.bf16.msra.mxu0 0
        %527 = vmatprep.subr.bf16.mxu0 0
        %528 = vmatpush1.bf16.msra.mxu0 0
        %529 = vmatprep.subr.bf16.mxu0 0
        %530 = vmatpush1.bf16.msra.mxu0 0
        %531 = vmatprep.subr.bf16.mxu0 0
        %532 = vmatpush1.bf16.msra.mxu0 0
        %533 = vmatprep.subr.bf16.mxu0 0
        %534 = vmatpush1.bf16.msra.mxu0 0
        %535 = vmatprep.subr.bf16.mxu0 0
        %536 = vmatpush1.bf16.msra.mxu0 0
        %537 = vmatprep.subr.bf16.mxu0 0
        %538 = vmatpush1.bf16.msra.mxu0 0
        %539 = vmatprep.mubr.bf16.mxu0 0
        %540 = vmatmul.mubr.bf16.gmra.mrb[0].mxu0 %v496
        %v541 = vpop.f32.mrb[0].mxu0
        %v542 = vadd.f32 %v437, %v541
        %v543 = vpop.f32.mrb[0].mxu0
        %v544 = vpop.f32.mrb[0].mxu0
        %v545 = vadd.f32 %v442, %v544
        %v546 = vpop.f32.mrb[0].mxu0
        %547 = vmatprep.mubr.bf16.mxu0 0
        %548 = vmatmul.mubr.bf16.gmra.mrb[0].mxu0 %v499
        %v549 = vpop.f32.mrb[0].mxu0
        %v550 = vadd.f32 %v447, %v549
        %v551 = vpop.f32.mrb[0].mxu0
        %v552 = vpop.f32.mrb[0].mxu0
        %v553 = vadd.f32 %v452, %v552
        %v554 = vpop.f32.mrb[0].mxu0
        %555 = vmatprep.mubr.bf16.mxu0 0
        %556 = vmatmul.mubr.bf16.gmra.mrb[0].mxu0 %v502
        %v557 = vpop.f32.mrb[0].mxu0
        %v558 = vadd.f32 %v457, %v557
        %v559 = vpop.f32.mrb[0].mxu0
        %v560 = vpop.f32.mrb[0].mxu0
        %v561 = vadd.f32 %v462, %v560
        %v562 = vpop.f32.mrb[0].mxu0
        %563 = vmatprep.mubr.bf16.mxu0 0
        %564 = vmatmul.mubr.bf16.gmra.mrb[0].mxu0 %v505
        %v565 = vpop.f32.mrb[0].mxu0
        %v566 = vadd.f32 %v467, %v565
        %v567 = vpop.f32.mrb[0].mxu0
        %v568 = vpop.f32.mrb[0].mxu0
        %v569 = vadd.f32 %v472, %v568
        %v570 = vpop.f32.mrb[0].mxu0
        %571 = vdwg.mxu0
        %v572 = vmax.f32 %v542, 0.0
        %v573 = vmax.f32 %v545, 0.0
        %v574 = vmax.f32 %v550, 0.0
        %v575 = vmax.f32 %v553, 0.0
        %v576 = vmax.f32 %v558, 0.0
        %v577 = vmax.f32 %v561, 0.0
        %v578 = vmax.f32 %v566, 0.0
        %v579 = vmax.f32 %v569, 0.0
        %v580 = vpack.c.bf16 %v573, %v572
        %v581 = vpack.c.bf16 %v575, %v574
        %v582 = vpack.c.bf16 %v577, %v576
        %v583 = vpack.c.bf16 %v579, %v578
        %v584 = vld [vmem:[%s5] sm:$0xf]
        %v585 = vld [vmem:[%s5 + $0x4] sm:$0xf]
        %v586 = vld [vmem:[%s5 + $0x8] sm:$0xf]
        %v587 = vld [vmem:[%s5 + $0xc] sm:$0xf]
        %v588 = vld [vmem:[%s5 + $0x10] sm:$0xf]
        %v589 = vld [vmem:[%s5 + $0x14] sm:$0xf]
        %v590 = vld [vmem:[%s5 + $0x18] sm:$0xf]
        %v591 = vld [vmem:[%s5 + $0x1c] sm:$0xf]
        %v592 = vld [vmem:[%s5 + $0x20] sm:$0xf]
        %v593 = vld [vmem:[%s5 + $0x24] sm:$0xf]
        %v594 = vld [vmem:[%s5 + $0x28] sm:$0xf]
        %v595 = vld [vmem:[%s5 + $0x2c] sm:$0xf]
        %v596 = vld [vmem:[%s5 + $0x30] sm:$0xf]
        %v597 = vld [vmem:[%s5 + $0x34] sm:$0xf]
        %v598 = vld [vmem:[%s5 + $0x38] sm:$0xf]
        %v599 = vld [vmem:[%s5 + $0x3c] sm:$0xf]
        %v600 = vld [vmem:[%s6] sm:$0xff]
        %v601 = vld [vmem:[%s6 + $0x8] sm:$0xff]
        %v602 = vld [vmem:[%s6 + $0x10] sm:$0xff]
        %v603 = vld [vmem:[%s6 + $0x18] sm:$0xff]
        %v604 = vld [vmem:[%s6 + $0x20] sm:$0xff]
        %v605 = vld [vmem:[%s6 + $0x28] sm:$0xff]
        %v606 = vld [vmem:[%s6 + $0x30] sm:$0xff]
        %v607 = vld [vmem:[%s6 + $0x38] sm:$0xff]
        %v608 = vld [vmem:[%s6 + $0x40] sm:$0xff]
        %v609 = vld [vmem:[%s6 + $0x48] sm:$0xff]
        %v610 = vld [vmem:[%s6 + $0x50] sm:$0xff]
        %v611 = vld [vmem:[%s6 + $0x58] sm:$0xff]
        %v612 = vld [vmem:[%s6 + $0x60] sm:$0xff]
        %v613 = vld [vmem:[%s6 + $0x68] sm:$0xff]
        %v614 = vld [vmem:[%s6 + $0x70] sm:$0xff]
        %v615 = vld [vmem:[%s6 + $0x78] sm:$0xff]
        %617 = vset.pattern.permute.xlu0 0
        %618 = vperm.xlu0 %617, %v600
        %v619 = vpop.permute.xlu0 %618
        %622 = vset.pattern.permute.xlu0 0
        %623 = vperm.xlu0 %622, %v601
        %v624 = vpop.permute.xlu0 %623
        %627 = vset.pattern.permute.xlu0 0
        %628 = vperm.xlu0 %627, %v602
        %v629 = vpop.permute.xlu0 %628
        %632 = vset.pattern.permute.xlu0 0
        %633 = vperm.xlu0 %632, %v603
        %v634 = vpop.permute.xlu0 %633
        %637 = vset.pattern.permute.xlu0 0
        %638 = vperm.xlu0 %637, %v604
        %v639 = vpop.permute.xlu0 %638
        %642 = vset.pattern.permute.xlu0 0
        %643 = vperm.xlu0 %642, %v605
        %v644 = vpop.permute.xlu0 %643
        %647 = vset.pattern.permute.xlu0 0
        %648 = vperm.xlu0 %647, %v606
        %v649 = vpop.permute.xlu0 %648
        %652 = vset.pattern.permute.xlu0 0
        %653 = vperm.xlu0 %652, %v607
        %v654 = vpop.permute.xlu0 %653
        %657 = vset.pattern.permute.xlu0 0
        %658 = vperm.xlu0 %657, %v608
        %v659 = vpop.permute.xlu0 %658
        %662 = vset.pattern.permute.xlu0 0
        %663 = vperm.xlu0 %662, %v609
        %v664 = vpop.permute.xlu0 %663
        %667 = vset.pattern.permute.xlu0 0
        %668 = vperm.xlu0 %667, %v610
        %v669 = vpop.permute.xlu0 %668
        %672 = vset.pattern.permute.xlu0 0
        %673 = vperm.xlu0 %672, %v611
        %v674 = vpop.permute.xlu0 %673
        %677 = vset.pattern.permute.xlu0 0
        %678 = vperm.xlu0 %677, %v612
        %v679 = vpop.permute.xlu0 %678
        %682 = vset.pattern.permute.xlu0 0
        %683 = vperm.xlu0 %682, %v613
        %v684 = vpop.permute.xlu0 %683
        %687 = vset.pattern.permute.xlu0 0
        %688 = vperm.xlu0 %687, %v614
        %v689 = vpop.permute.xlu0 %688
        %692 = vset.pattern.permute.xlu0 0
        %693 = vperm.xlu0 %692, %v615
        %v694 = vpop.permute.xlu0 %693
        %v712 = vunpack.c.l.b16 %v584
        %v713 = vunpack.c.l.b16 %v585
        %v714 = vunpack.c.l.b16 %v586
        %v715 = vunpack.c.l.b16 %v587
        %v716 = vunpack.c.l.b16 %v588
        %v717 = vunpack.c.l.b16 %v589
        %v718 = vunpack.c.l.b16 %v590
        %v719 = vunpack.c.l.b16 %v591
        %v720 = vunpack.c.l.b16 %v592
        %v721 = vunpack.c.l.b16 %v593
        %v722 = vunpack.c.l.b16 %v594
        %v723 = vunpack.c.l.b16 %v595
        %v724 = vunpack.c.l.b16 %v596
        %v725 = vunpack.c.l.b16 %v597
        %v726 = vunpack.c.l.b16 %v598
        %v727 = vunpack.c.l.b16 %v599
        %v728 = vpack.c.b16 %v713, %v712
        %v729 = vpack.c.b16 %v715, %v714
        %v730 = vpack.c.b16 %v717, %v716
        %v731 = vpack.c.b16 %v719, %v718
        %v732 = vpack.c.b16 %v721, %v720
        %v733 = vpack.c.b16 %v723, %v722
        %v734 = vpack.c.b16 %v725, %v724
        %v735 = vpack.c.b16 %v727, %v726
        %vm736 = vcmask 523264
        %v738 = vsel %vm736, %v728, 0
        %v741 = vsel %vm736, %v729, 0
        %v744 = vsel %vm736, %v730, 0
        %v747 = vsel %vm736, %v731, 0
        %v750 = vsel %vm736, %v732, 0
        %v753 = vsel %vm736, %v733, 0
        %v756 = vsel %vm736, %v734, 0
        %v759 = vsel %vm736, %v735, 0
        %761 = vmatprep.subr.bf16.mxu0 0
        %762 = vmatpush1.bf16.msra.mxu0 %v580
        %763 = vmatprep.subr.bf16.mxu0 0
        %764 = vmatpush1.bf16.msra.mxu0 %v581
        %765 = vmatprep.subr.bf16.mxu0 0
        %766 = vmatpush1.bf16.msra.mxu0 %v582
        %767 = vmatprep.subr.bf16.mxu0 0
        %768 = vmatpush1.bf16.msra.mxu0 %v583
        %769 = vmatprep.subr.bf16.mxu0 0
        %770 = vmatpush1.bf16.msra.mxu0 0
        %771 = vmatprep.subr.bf16.mxu0 0
        %772 = vmatpush1.bf16.msra.mxu0 0
        %773 = vmatprep.subr.bf16.mxu0 0
        %774 = vmatpush1.bf16.msra.mxu0 0
        %775 = vmatprep.subr.bf16.mxu0 0
        %776 = vmatpush1.bf16.msra.mxu0 0
        %777 = vmatprep.subr.bf16.mxu0 0
        %778 = vmatpush1.bf16.msra.mxu0 0
        %779 = vmatprep.subr.bf16.mxu0 0
        %780 = vmatpush1.bf16.msra.mxu0 0
        %781 = vmatprep.subr.bf16.mxu0 0
        %782 = vmatpush1.bf16.msra.mxu0 0
        %783 = vmatprep.subr.bf16.mxu0 0
        %784 = vmatpush1.bf16.msra.mxu0 0
        %785 = vmatprep.subr.bf16.mxu0 0
        %786 = vmatpush1.bf16.msra.mxu0 0
        %787 = vmatprep.subr.bf16.mxu0 0
        %788 = vmatpush1.bf16.msra.mxu0 0
        %789 = vmatprep.subr.bf16.mxu0 0
        %790 = vmatpush1.bf16.msra.mxu0 0
        %791 = vmatprep.subr.bf16.mxu0 0
        %792 = vmatpush1.bf16.msra.mxu0 0
        %793 = vmatprep.mubr.bf16.mxu0 0
        %794 = vmatmul.mubr.bf16.gmra.mrb[0].mxu0 %v738
        %v795 = vpop.f32.mrb[0].mxu0
        %v796 = vadd.f32 %v619, %v795
        %v797 = vpop.f32.mrb[0].mxu0
        %v798 = vpop.f32.mrb[0].mxu0
        %v799 = vadd.f32 %v624, %v798
        %v800 = vpop.f32.mrb[0].mxu0
        %801 = vmatprep.mubr.bf16.mxu0 0
        %802 = vmatmul.mubr.bf16.gmra.mrb[0].mxu0 %v741
        %v803 = vpop.f32.mrb[0].mxu0
        %v804 = vadd.f32 %v629, %v803
        %v805 = vpop.f32.mrb[0].mxu0
        %v806 = vpop.f32.mrb[0].mxu0
        %v807 = vadd.f32 %v634, %v806
        %v808 = vpop.f32.mrb[0].mxu0
        %809 = vmatprep.mubr.bf16.mxu0 0
        %810 = vmatmul.mubr.bf16.gmra.mrb[0].mxu0 %v744
        %v811 = vpop.f32.mrb[0].mxu0
        %v812 = vadd.f32 %v639, %v811
        %v813 = vpop.f32.mrb[0].mxu0
        %v814 = vpop.f32.mrb[0].mxu0
        %v815 = vadd.f32 %v644, %v814
        %v816 = vpop.f32.mrb[0].mxu0
        %817 = vmatprep.mubr.bf16.mxu0 0
        %818 = vmatmul.mubr.bf16.gmra.mrb[0].mxu0 %v747
        %v819 = vpop.f32.mrb[0].mxu0
        %v820 = vadd.f32 %v649, %v819
        %v821 = vpop.f32.mrb[0].mxu0
        %v822 = vpop.f32.mrb[0].mxu0
        %v823 = vadd.f32 %v654, %v822
        %v824 = vpop.f32.mrb[0].mxu0
        %825 = vmatprep.mubr.bf16.mxu0 0
        %826 = vmatmul.mubr.bf16.gmra.mrb[0].mxu0 %v750
        %v827 = vpop.f32.mrb[0].mxu0
        %v828 = vadd.f32 %v659, %v827
        %v829 = vpop.f32.mrb[0].mxu0
        %v830 = vpop.f32.mrb[0].mxu0
        %v831 = vadd.f32 %v664, %v830
        %v832 = vpop.f32.mrb[0].mxu0
        %833 = vmatprep.mubr.bf16.mxu0 0
        %834 = vmatmul.mubr.bf16.gmra.mrb[0].mxu0 %v753
        %v835 = vpop.f32.mrb[0].mxu0
        %v836 = vadd.f32 %v669, %v835
        %v837 = vpop.f32.mrb[0].mxu0
        %v838 = vpop.f32.mrb[0].mxu0
        %v839 = vadd.f32 %v674, %v838
        %v840 = vpop.f32.mrb[0].mxu0
        %841 = vmatprep.mubr.bf16.mxu0 0
        %842 = vmatmul.mubr.bf16.gmra.mrb[0].mxu0 %v756
        %v843 = vpop.f32.mrb[0].mxu0
        %v844 = vadd.f32 %v679, %v843
        %v845 = vpop.f32.mrb[0].mxu0
        %v846 = vpop.f32.mrb[0].mxu0
        %v847 = vadd.f32 %v684, %v846
        %v848 = vpop.f32.mrb[0].mxu0
        %849 = vmatprep.mubr.bf16.mxu0 0
        %850 = vmatmul.mubr.bf16.gmra.mrb[0].mxu0 %v759
        %v851 = vpop.f32.mrb[0].mxu0
        %v852 = vadd.f32 %v689, %v851
        %v853 = vpop.f32.mrb[0].mxu0
        %v854 = vpop.f32.mrb[0].mxu0
        %v855 = vadd.f32 %v694, %v854
        %v856 = vpop.f32.mrb[0].mxu0
        %857 = vdwg.mxu0
        %v858 = vmax.f32 %v796, 0.0
        %v859 = vmax.f32 %v799, 0.0
        %v860 = vmax.f32 %v804, 0.0
        %v861 = vmax.f32 %v807, 0.0
        %v862 = vmax.f32 %v812, 0.0
        %v863 = vmax.f32 %v815, 0.0
        %v864 = vmax.f32 %v820, 0.0
        %v865 = vmax.f32 %v823, 0.0
        %v866 = vmax.f32 %v828, 0.0
        %v867 = vmax.f32 %v831, 0.0
        %v868 = vmax.f32 %v836, 0.0
        %v869 = vmax.f32 %v839, 0.0
        %v870 = vmax.f32 %v844, 0.0
        %v871 = vmax.f32 %v847, 0.0
        %v872 = vmax.f32 %v852, 0.0
        %v873 = vmax.f32 %v855, 0.0
        %p874 = scmp.eq.s32.totalorder %s28, 0
        // Predicated region
        $region49: #{tpu_custom_call.1} parent=47 // pred_check
          %p875 = pneg %p874
        $region50: #{tpu_custom_call.1} parent=47 // pred_check_branch
          %877 = sbr.rel (%p875) target = $region52
        $region51: #{tpu_custom_call.1} parent=47 // pred_region
          %878 = vst [vmem:[%s302] sm:$0x1] 0.0
        $region52: #{tpu_custom_call.1} parent=47 // pred_fallthru
          _
        %v879 = vld [vmem:[%s302] sm:$0x1]
        %vm880 = vcmask 130048
        %v881 = vsel %vm880, %v858, -inf
        %882 = vmax.xlane.f32.xlu0 %v881
        %v883 = vpop.xlane.xlu0 %882
        %v884 = vsel %vm880, %v859, -inf
        %885 = vmax.xlane.f32.xlu0 %v884
        %v886 = vpop.xlane.xlu0 %885
        %v887 = vsel %vm880, %v860, -inf
        %888 = vmax.xlane.f32.xlu0 %v887
        %v889 = vpop.xlane.xlu0 %888
        %v890 = vsel %vm880, %v861, -inf
        %891 = vmax.xlane.f32.xlu0 %v890
        %v892 = vpop.xlane.xlu0 %891
        %v893 = vsel %vm880, %v862, -inf
        %894 = vmax.xlane.f32.xlu0 %v893
        %v895 = vpop.xlane.xlu0 %894
        %v896 = vsel %vm880, %v863, -inf
        %897 = vmax.xlane.f32.xlu0 %v896
        %v898 = vpop.xlane.xlu0 %897
        %v899 = vsel %vm880, %v864, -inf
        %900 = vmax.xlane.f32.xlu0 %v899
        %v901 = vpop.xlane.xlu0 %900
        %v902 = vsel %vm880, %v865, -inf
        %903 = vmax.xlane.f32.xlu0 %v902
        %v904 = vpop.xlane.xlu0 %903
        %v905 = vsel %vm880, %v866, -inf
        %906 = vmax.xlane.f32.xlu0 %v905
        %v907 = vpop.xlane.xlu0 %906
        %v908 = vsel %vm880, %v867, -inf
        %909 = vmax.xlane.f32.xlu0 %v908
        %v910 = vpop.xlane.xlu0 %909
        %v911 = vsel %vm880, %v868, -inf
        %912 = vmax.xlane.f32.xlu0 %v911
        %v913 = vpop.xlane.xlu0 %912
        %v914 = vsel %vm880, %v869, -inf
        %915 = vmax.xlane.f32.xlu0 %v914
        %v916 = vpop.xlane.xlu0 %915
        %v917 = vsel %vm880, %v870, -inf
        %918 = vmax.xlane.f32.xlu0 %v917
        %v919 = vpop.xlane.xlu0 %918
        %v920 = vsel %vm880, %v871, -inf
        %921 = vmax.xlane.f32.xlu0 %v920
        %v922 = vpop.xlane.xlu0 %921
        %v923 = vsel %vm880, %v872, -inf
        %924 = vmax.xlane.f32.xlu0 %v923
        %v925 = vpop.xlane.xlu0 %924
        %v926 = vsel %vm880, %v873, -inf
        %927 = vmax.xlane.f32.xlu0 %v926
        %v928 = vpop.xlane.xlu0 %927
        %v945 = vlaneseq
        %v946 = vshrl.u32 %v945, 7
        %v947 = vsub.s32 0, %v946
        %v948 = vrot.slane %v883, %v947
        %v949 = vlaneseq
        %v950 = vshrl.u32 %v949, 7
        %v951 = vsub.s32 1, %v950
        %v952 = vrot.slane %v883, %v951
        %v953 = vlaneseq
        %v954 = vshrl.u32 %v953, 7
        %v955 = vsub.s32 2, %v954
        %v956 = vrot.slane %v883, %v955
        %v957 = vlaneseq
        %v958 = vshrl.u32 %v957, 7
        %v959 = vsub.s32 3, %v958
        %v960 = vrot.slane %v883, %v959
        %v961 = vlaneseq
        %v962 = vshrl.u32 %v961, 7
        %v963 = vsub.s32 4, %v962
        %v964 = vrot.slane %v883, %v963
        %v965 = vlaneseq
        %v966 = vshrl.u32 %v965, 7
        %v967 = vsub.s32 5, %v966
        %v968 = vrot.slane %v883, %v967
        %v969 = vlaneseq
        %v970 = vshrl.u32 %v969, 7
        %v971 = vsub.s32 6, %v970
        %v972 = vrot.slane %v883, %v971
        %v973 = vlaneseq
        %v974 = vshrl.u32 %v973, 7
        %v975 = vsub.s32 7, %v974
        %v976 = vrot.slane %v883, %v975
        %v977 = vlaneseq
        %v978 = vshrl.u32 %v977, 7
        %v979 = vsub.s32 0, %v978
        %v980 = vrot.slane %v886, %v979
        %v981 = vlaneseq
        %v982 = vshrl.u32 %v981, 7
        %v983 = vsub.s32 1, %v982
        %v984 = vrot.slane %v886, %v983
        %v985 = vlaneseq
        %v986 = vshrl.u32 %v985, 7
        %v987 = vsub.s32 2, %v986
        %v988 = vrot.slane %v886, %v987
        %v989 = vlaneseq
        %v990 = vshrl.u32 %v989, 7
        %v991 = vsub.s32 3, %v990
        %v992 = vrot.slane %v886, %v991
        %v993 = vlaneseq
        %v994 = vshrl.u32 %v993, 7
        %v995 = vsub.s32 4, %v994
        %v996 = vrot.slane %v886, %v995
        %v997 = vlaneseq
        %v998 = vshrl.u32 %v997, 7
        %v999 = vsub.s32 5, %v998
        %v1000 = vrot.slane %v886, %v999
        %v1001 = vlaneseq
        %v1002 = vshrl.u32 %v1001, 7
        %v1003 = vsub.s32 6, %v1002
        %v1004 = vrot.slane %v886, %v1003
        %v1005 = vlaneseq
        %v1006 = vshrl.u32 %v1005, 7
        %v1007 = vsub.s32 7, %v1006
        %v1008 = vrot.slane %v886, %v1007
        %v1009 = vlaneseq
        %v1010 = vshrl.u32 %v1009, 7
        %v1011 = vsub.s32 0, %v1010
        %v1012 = vrot.slane %v889, %v1011
        %v1013 = vlaneseq
        %v1014 = vshrl.u32 %v1013, 7
        %v1015 = vsub.s32 1, %v1014
        %v1016 = vrot.slane %v889, %v1015
        %v1017 = vlaneseq
        %v1018 = vshrl.u32 %v1017, 7
        %v1019 = vsub.s32 2, %v1018
        %v1020 = vrot.slane %v889, %v1019
        %v1021 = vlaneseq
        %v1022 = vshrl.u32 %v1021, 7
        %v1023 = vsub.s32 3, %v1022
        %v1024 = vrot.slane %v889, %v1023
        %v1025 = vlaneseq
        %v1026 = vshrl.u32 %v1025, 7
        %v1027 = vsub.s32 4, %v1026
        %v1028 = vrot.slane %v889, %v1027
        %v1029 = vlaneseq
        %v1030 = vshrl.u32 %v1029, 7
        %v1031 = vsub.s32 5, %v1030
        %v1032 = vrot.slane %v889, %v1031
        %v1033 = vlaneseq
        %v1034 = vshrl.u32 %v1033, 7
        %v1035 = vsub.s32 6, %v1034
        %v1036 = vrot.slane %v889, %v1035
        %v1037 = vlaneseq
        %v1038 = vshrl.u32 %v1037, 7
        %v1039 = vsub.s32 7, %v1038
        %v1040 = vrot.slane %v889, %v1039
        %v1041 = vlaneseq
        %v1042 = vshrl.u32 %v1041, 7
        %v1043 = vsub.s32 0, %v1042
        %v1044 = vrot.slane %v892, %v1043
        %v1045 = vlaneseq
        %v1046 = vshrl.u32 %v1045, 7
        %v1047 = vsub.s32 1, %v1046
        %v1048 = vrot.slane %v892, %v1047
        %v1049 = vlaneseq
        %v1050 = vshrl.u32 %v1049, 7
        %v1051 = vsub.s32 2, %v1050
        %v1052 = vrot.slane %v892, %v1051
        %v1053 = vlaneseq
        %v1054 = vshrl.u32 %v1053, 7
        %v1055 = vsub.s32 3, %v1054
        %v1056 = vrot.slane %v892, %v1055
        %v1057 = vlaneseq
        %v1058 = vshrl.u32 %v1057, 7
        %v1059 = vsub.s32 4, %v1058
        %v1060 = vrot.slane %v892, %v1059
        %v1061 = vlaneseq
        %v1062 = vshrl.u32 %v1061, 7
        %v1063 = vsub.s32 5, %v1062
        %v1064 = vrot.slane %v892, %v1063
        %v1065 = vlaneseq
        %v1066 = vshrl.u32 %v1065, 7
        %v1067 = vsub.s32 6, %v1066
        %v1068 = vrot.slane %v892, %v1067
        %v1069 = vlaneseq
        %v1070 = vshrl.u32 %v1069, 7
        %v1071 = vsub.s32 7, %v1070
        %v1072 = vrot.slane %v892, %v1071
        %v1073 = vlaneseq
        %v1074 = vshrl.u32 %v1073, 7
        %v1075 = vsub.s32 0, %v1074
        %v1076 = vrot.slane %v895, %v1075
        %v1077 = vlaneseq
        %v1078 = vshrl.u32 %v1077, 7
        %v1079 = vsub.s32 1, %v1078
        %v1080 = vrot.slane %v895, %v1079
        %v1081 = vlaneseq
        %v1082 = vshrl.u32 %v1081, 7
        %v1083 = vsub.s32 2, %v1082
        %v1084 = vrot.slane %v895, %v1083
        %v1085 = vlaneseq
        %v1086 = vshrl.u32 %v1085, 7
        %v1087 = vsub.s32 3, %v1086
        %v1088 = vrot.slane %v895, %v1087
        %v1089 = vlaneseq
        %v1090 = vshrl.u32 %v1089, 7
        %v1091 = vsub.s32 4, %v1090
        %v1092 = vrot.slane %v895, %v1091
        %v1093 = vlaneseq
        %v1094 = vshrl.u32 %v1093, 7
        %v1095 = vsub.s32 5, %v1094
        %v1096 = vrot.slane %v895, %v1095
        %v1097 = vlaneseq
        %v1098 = vshrl.u32 %v1097, 7
        %v1099 = vsub.s32 6, %v1098
        %v1100 = vrot.slane %v895, %v1099
        %v1101 = vlaneseq
        %v1102 = vshrl.u32 %v1101, 7
        %v1103 = vsub.s32 7, %v1102
        %v1104 = vrot.slane %v895, %v1103
        %v1105 = vlaneseq
        %v1106 = vshrl.u32 %v1105, 7
        %v1107 = vsub.s32 0, %v1106
        %v1108 = vrot.slane %v898, %v1107
        %v1109 = vlaneseq
        %v1110 = vshrl.u32 %v1109, 7
        %v1111 = vsub.s32 1, %v1110
        %v1112 = vrot.slane %v898, %v1111
        %v1113 = vlaneseq
        %v1114 = vshrl.u32 %v1113, 7
        %v1115 = vsub.s32 2, %v1114
        %v1116 = vrot.slane %v898, %v1115
        %v1117 = vlaneseq
        %v1118 = vshrl.u32 %v1117, 7
        %v1119 = vsub.s32 3, %v1118
        %v1120 = vrot.slane %v898, %v1119
        %v1121 = vlaneseq
        %v1122 = vshrl.u32 %v1121, 7
        %v1123 = vsub.s32 4, %v1122
        %v1124 = vrot.slane %v898, %v1123
        %v1125 = vlaneseq
        %v1126 = vshrl.u32 %v1125, 7
        %v1127 = vsub.s32 5, %v1126
        %v1128 = vrot.slane %v898, %v1127
        %v1129 = vlaneseq
        %v1130 = vshrl.u32 %v1129, 7
        %v1131 = vsub.s32 6, %v1130
        %v1132 = vrot.slane %v898, %v1131
        %v1133 = vlaneseq
        %v1134 = vshrl.u32 %v1133, 7
        %v1135 = vsub.s32 7, %v1134
        %v1136 = vrot.slane %v898, %v1135
        %v1137 = vlaneseq
        %v1138 = vshrl.u32 %v1137, 7
        %v1139 = vsub.s32 0, %v1138
        %v1140 = vrot.slane %v901, %v1139
        %v1141 = vlaneseq
        %v1142 = vshrl.u32 %v1141, 7
        %v1143 = vsub.s32 1, %v1142
        %v1144 = vrot.slane %v901, %v1143
        %v1145 = vlaneseq
        %v1146 = vshrl.u32 %v1145, 7
        %v1147 = vsub.s32 2, %v1146
        %v1148 = vrot.slane %v901, %v1147
        %v1149 = vlaneseq
        %v1150 = vshrl.u32 %v1149, 7
        %v1151 = vsub.s32 3, %v1150
        %v1152 = vrot.slane %v901, %v1151
        %v1153 = vlaneseq
        %v1154 = vshrl.u32 %v1153, 7
        %v1155 = vsub.s32 4, %v1154
        %v1156 = vrot.slane %v901, %v1155
        %v1157 = vlaneseq
        %v1158 = vshrl.u32 %v1157, 7
        %v1159 = vsub.s32 5, %v1158
        %v1160 = vrot.slane %v901, %v1159
        %v1161 = vlaneseq
        %v1162 = vshrl.u32 %v1161, 7
        %v1163 = vsub.s32 6, %v1162
        %v1164 = vrot.slane %v901, %v1163
        %v1165 = vlaneseq
        %v1166 = vshrl.u32 %v1165, 7
        %v1167 = vsub.s32 7, %v1166
        %v1168 = vrot.slane %v901, %v1167
        %v1169 = vlaneseq
        %v1170 = vshrl.u32 %v1169, 7
        %v1171 = vsub.s32 0, %v1170
        %v1172 = vrot.slane %v904, %v1171
        %v1173 = vlaneseq
        %v1174 = vshrl.u32 %v1173, 7
        %v1175 = vsub.s32 1, %v1174
        %v1176 = vrot.slane %v904, %v1175
        %v1177 = vlaneseq
        %v1178 = vshrl.u32 %v1177, 7
        %v1179 = vsub.s32 2, %v1178
        %v1180 = vrot.slane %v904, %v1179
        %v1181 = vlaneseq
        %v1182 = vshrl.u32 %v1181, 7
        %v1183 = vsub.s32 3, %v1182
        %v1184 = vrot.slane %v904, %v1183
        %v1185 = vlaneseq
        %v1186 = vshrl.u32 %v1185, 7
        %v1187 = vsub.s32 4, %v1186
        %v1188 = vrot.slane %v904, %v1187
        %v1189 = vlaneseq
        %v1190 = vshrl.u32 %v1189, 7
        %v1191 = vsub.s32 5, %v1190
        %v1192 = vrot.slane %v904, %v1191
        %v1193 = vlaneseq
        %v1194 = vshrl.u32 %v1193, 7
        %v1195 = vsub.s32 6, %v1194
        %v1196 = vrot.slane %v904, %v1195
        %v1197 = vlaneseq
        %v1198 = vshrl.u32 %v1197, 7
        %v1199 = vsub.s32 7, %v1198
        %v1200 = vrot.slane %v904, %v1199
        %v1201 = vlaneseq
        %v1202 = vshrl.u32 %v1201, 7
        %v1203 = vsub.s32 0, %v1202
        %v1204 = vrot.slane %v907, %v1203
        %v1205 = vlaneseq
        %v1206 = vshrl.u32 %v1205, 7
        %v1207 = vsub.s32 1, %v1206
        %v1208 = vrot.slane %v907, %v1207
        %v1209 = vlaneseq
        %v1210 = vshrl.u32 %v1209, 7
        %v1211 = vsub.s32 2, %v1210
        %v1212 = vrot.slane %v907, %v1211
        %v1213 = vlaneseq
        %v1214 = vshrl.u32 %v1213, 7
        %v1215 = vsub.s32 3, %v1214
        %v1216 = vrot.slane %v907, %v1215
        %v1217 = vlaneseq
        %v1218 = vshrl.u32 %v1217, 7
        %v1219 = vsub.s32 4, %v1218
        %v1220 = vrot.slane %v907, %v1219
        %v1221 = vlaneseq
        %v1222 = vshrl.u32 %v1221, 7
        %v1223 = vsub.s32 5, %v1222
        %v1224 = vrot.slane %v907, %v1223
        %v1225 = vlaneseq
        %v1226 = vshrl.u32 %v1225, 7
        %v1227 = vsub.s32 6, %v1226
        %v1228 = vrot.slane %v907, %v1227
        %v1229 = vlaneseq
        %v1230 = vshrl.u32 %v1229, 7
        %v1231 = vsub.s32 7, %v1230
        %v1232 = vrot.slane %v907, %v1231
        %v1233 = vlaneseq
        %v1234 = vshrl.u32 %v1233, 7
        %v1235 = vsub.s32 0, %v1234
        %v1236 = vrot.slane %v910, %v1235
        %v1237 = vlaneseq
        %v1238 = vshrl.u32 %v1237, 7
        %v1239 = vsub.s32 1, %v1238
        %v1240 = vrot.slane %v910, %v1239
        %v1241 = vlaneseq
        %v1242 = vshrl.u32 %v1241, 7
        %v1243 = vsub.s32 2, %v1242
        %v1244 = vrot.slane %v910, %v1243
        %v1245 = vlaneseq
        %v1246 = vshrl.u32 %v1245, 7
        %v1247 = vsub.s32 3, %v1246
        %v1248 = vrot.slane %v910, %v1247
        %v1249 = vlaneseq
        %v1250 = vshrl.u32 %v1249, 7
        %v1251 = vsub.s32 4, %v1250
        %v1252 = vrot.slane %v910, %v1251
        %v1253 = vlaneseq
        %v1254 = vshrl.u32 %v1253, 7
        %v1255 = vsub.s32 5, %v1254
        %v1256 = vrot.slane %v910, %v1255
        %v1257 = vlaneseq
        %v1258 = vshrl.u32 %v1257, 7
        %v1259 = vsub.s32 6, %v1258
        %v1260 = vrot.slane %v910, %v1259
        %v1261 = vlaneseq
        %v1262 = vshrl.u32 %v1261, 7
        %v1263 = vsub.s32 7, %v1262
        %v1264 = vrot.slane %v910, %v1263
        %v1265 = vlaneseq
        %v1266 = vshrl.u32 %v1265, 7
        %v1267 = vsub.s32 0, %v1266
        %v1268 = vrot.slane %v913, %v1267
        %v1269 = vlaneseq
        %v1270 = vshrl.u32 %v1269, 7
        %v1271 = vsub.s32 1, %v1270
        %v1272 = vrot.slane %v913, %v1271
        %v1273 = vlaneseq
        %v1274 = vshrl.u32 %v1273, 7
        %v1275 = vsub.s32 2, %v1274
        %v1276 = vrot.slane %v913, %v1275
        %v1277 = vlaneseq
        %v1278 = vshrl.u32 %v1277, 7
        %v1279 = vsub.s32 3, %v1278
        %v1280 = vrot.slane %v913, %v1279
        %v1281 = vlaneseq
        %v1282 = vshrl.u32 %v1281, 7
        %v1283 = vsub.s32 4, %v1282
        %v1284 = vrot.slane %v913, %v1283
        %v1285 = vlaneseq
        %v1286 = vshrl.u32 %v1285, 7
        %v1287 = vsub.s32 5, %v1286
        %v1288 = vrot.slane %v913, %v1287
        %v1289 = vlaneseq
        %v1290 = vshrl.u32 %v1289, 7
        %v1291 = vsub.s32 6, %v1290
        %v1292 = vrot.slane %v913, %v1291
        %v1293 = vlaneseq
        %v1294 = vshrl.u32 %v1293, 7
        %v1295 = vsub.s32 7, %v1294
        %v1296 = vrot.slane %v913, %v1295
        %v1297 = vlaneseq
        %v1298 = vshrl.u32 %v1297, 7
        %v1299 = vsub.s32 0, %v1298
        %v1300 = vrot.slane %v916, %v1299
        %v1301 = vlaneseq
        %v1302 = vshrl.u32 %v1301, 7
        %v1303 = vsub.s32 1, %v1302
        %v1304 = vrot.slane %v916, %v1303
        %v1305 = vlaneseq
        %v1306 = vshrl.u32 %v1305, 7
        %v1307 = vsub.s32 2, %v1306
        %v1308 = vrot.slane %v916, %v1307
        %v1309 = vlaneseq
        %v1310 = vshrl.u32 %v1309, 7
        %v1311 = vsub.s32 3, %v1310
        %v1312 = vrot.slane %v916, %v1311
        %v1313 = vlaneseq
        %v1314 = vshrl.u32 %v1313, 7
        %v1315 = vsub.s32 4, %v1314
        %v1316 = vrot.slane %v916, %v1315
        %v1317 = vlaneseq
        %v1318 = vshrl.u32 %v1317, 7
        %v1319 = vsub.s32 5, %v1318
        %v1320 = vrot.slane %v916, %v1319
        %v1321 = vlaneseq
        %v1322 = vshrl.u32 %v1321, 7
        %v1323 = vsub.s32 6, %v1322
        %v1324 = vrot.slane %v916, %v1323
        %v1325 = vlaneseq
        %v1326 = vshrl.u32 %v1325, 7
        %v1327 = vsub.s32 7, %v1326
        %v1328 = vrot.slane %v916, %v1327
        %v1329 = vlaneseq
        %v1330 = vshrl.u32 %v1329, 7
        %v1331 = vsub.s32 0, %v1330
        %v1332 = vrot.slane %v919, %v1331
        %v1333 = vlaneseq
        %v1334 = vshrl.u32 %v1333, 7
        %v1335 = vsub.s32 1, %v1334
        %v1336 = vrot.slane %v919, %v1335
        %v1337 = vlaneseq
        %v1338 = vshrl.u32 %v1337, 7
        %v1339 = vsub.s32 2, %v1338
        %v1340 = vrot.slane %v919, %v1339
        %v1341 = vlaneseq
        %v1342 = vshrl.u32 %v1341, 7
        %v1343 = vsub.s32 3, %v1342
        %v1344 = vrot.slane %v919, %v1343
        %v1345 = vlaneseq
        %v1346 = vshrl.u32 %v1345, 7
        %v1347 = vsub.s32 4, %v1346
        %v1348 = vrot.slane %v919, %v1347
        %v1349 = vlaneseq
        %v1350 = vshrl.u32 %v1349, 7
        %v1351 = vsub.s32 5, %v1350
        %v1352 = vrot.slane %v919, %v1351
        %v1353 = vlaneseq
        %v1354 = vshrl.u32 %v1353, 7
        %v1355 = vsub.s32 6, %v1354
        %v1356 = vrot.slane %v919, %v1355
        %v1357 = vlaneseq
        %v1358 = vshrl.u32 %v1357, 7
        %v1359 = vsub.s32 7, %v1358
        %v1360 = vrot.slane %v919, %v1359
        %v1361 = vlaneseq
        %v1362 = vshrl.u32 %v1361, 7
        %v1363 = vsub.s32 0, %v1362
        %v1364 = vrot.slane %v922, %v1363
        %v1365 = vlaneseq
        %v1366 = vshrl.u32 %v1365, 7
        %v1367 = vsub.s32 1, %v1366
        %v1368 = vrot.slane %v922, %v1367
        %v1369 = vlaneseq
        %v1370 = vshrl.u32 %v1369, 7
        %v1371 = vsub.s32 2, %v1370
        %v1372 = vrot.slane %v922, %v1371
        %v1373 = vlaneseq
        %v1374 = vshrl.u32 %v1373, 7
        %v1375 = vsub.s32 3, %v1374
        %v1376 = vrot.slane %v922, %v1375
        %v1377 = vlaneseq
        %v1378 = vshrl.u32 %v1377, 7
        %v1379 = vsub.s32 4, %v1378
        %v1380 = vrot.slane %v922, %v1379
        %v1381 = vlaneseq
        %v1382 = vshrl.u32 %v1381, 7
        %v1383 = vsub.s32 5, %v1382
        %v1384 = vrot.slane %v922, %v1383
        %v1385 = vlaneseq
        %v1386 = vshrl.u32 %v1385, 7
        %v1387 = vsub.s32 6, %v1386
        %v1388 = vrot.slane %v922, %v1387
        %v1389 = vlaneseq
        %v1390 = vshrl.u32 %v1389, 7
        %v1391 = vsub.s32 7, %v1390
        %v1392 = vrot.slane %v922, %v1391
        %v1393 = vlaneseq
        %v1394 = vshrl.u32 %v1393, 7
        %v1395 = vsub.s32 0, %v1394
        %v1396 = vrot.slane %v925, %v1395
        %v1397 = vlaneseq
        %v1398 = vshrl.u32 %v1397, 7
        %v1399 = vsub.s32 1, %v1398
        %v1400 = vrot.slane %v925, %v1399
        %v1401 = vlaneseq
        %v1402 = vshrl.u32 %v1401, 7
        %v1403 = vsub.s32 2, %v1402
        %v1404 = vrot.slane %v925, %v1403
        %v1405 = vlaneseq
        %v1406 = vshrl.u32 %v1405, 7
        %v1407 = vsub.s32 3, %v1406
        %v1408 = vrot.slane %v925, %v1407
        %v1409 = vlaneseq
        %v1410 = vshrl.u32 %v1409, 7
        %v1411 = vsub.s32 4, %v1410
        %v1412 = vrot.slane %v925, %v1411
        %v1413 = vlaneseq
        %v1414 = vshrl.u32 %v1413, 7
        %v1415 = vsub.s32 5, %v1414
        %v1416 = vrot.slane %v925, %v1415
        %v1417 = vlaneseq
        %v1418 = vshrl.u32 %v1417, 7
        %v1419 = vsub.s32 6, %v1418
        %v1420 = vrot.slane %v925, %v1419
        %v1421 = vlaneseq
        %v1422 = vshrl.u32 %v1421, 7
        %v1423 = vsub.s32 7, %v1422
        %v1424 = vrot.slane %v925, %v1423
        %v1425 = vlaneseq
        %v1426 = vshrl.u32 %v1425, 7
        %v1427 = vsub.s32 0, %v1426
        %v1428 = vrot.slane %v928, %v1427
        %v1429 = vlaneseq
        %v1430 = vshrl.u32 %v1429, 7
        %v1431 = vsub.s32 1, %v1430
        %v1432 = vrot.slane %v928, %v1431
        %v1433 = vlaneseq
        %v1434 = vshrl.u32 %v1433, 7
        %v1435 = vsub.s32 2, %v1434
        %v1436 = vrot.slane %v928, %v1435
        %v1437 = vlaneseq
        %v1438 = vshrl.u32 %v1437, 7
        %v1439 = vsub.s32 3, %v1438
        %v1440 = vrot.slane %v928, %v1439
        %v1441 = vlaneseq
        %v1442 = vshrl.u32 %v1441, 7
        %v1443 = vsub.s32 4, %v1442
        %v1444 = vrot.slane %v928, %v1443
        %v1445 = vlaneseq
        %v1446 = vshrl.u32 %v1445, 7
        %v1447 = vsub.s32 5, %v1446
        %v1448 = vrot.slane %v928, %v1447
        %v1449 = vlaneseq
        %v1450 = vshrl.u32 %v1449, 7
        %v1451 = vsub.s32 6, %v1450
        %v1452 = vrot.slane %v928, %v1451
        %v1453 = vlaneseq
        %v1454 = vshrl.u32 %v1453, 7
        %v1455 = vsub.s32 7, %v1454
        %v1456 = vrot.slane %v928, %v1455
        %v1457 = vcombine.low %v948, %v952
        %v1458 = vcombine.low %v956, %v960
        %v1459 = vcombine.low %v964, %v968
        %v1460 = vcombine.low %v972, %v976
        %v1462 = vunpack.c.l.s4 1966171168
        %v1463 = vunpack.c.0.s8 %v1462
        %v1464 = vlaneseq
        %v1465 = vshrl.u32 %v1464, 7
        %v1466 = vsub.s32 %v1463, %v1465
        %v1467 = vrot.slane %v1457, %v1466
        %v1469 = vunpack.c.l.s4 1966171168
        %v1470 = vunpack.c.0.s8 %v1469
        %v1471 = vlaneseq
        %v1472 = vshrl.u32 %v1471, 7
        %v1473 = vsub.s32 %v1470, %v1472
        %v1474 = vrot.slane %v1458, %v1473
        %v1476 = vunpack.c.l.s4 1966171168
        %v1477 = vunpack.c.0.s8 %v1476
        %v1478 = vlaneseq
        %v1479 = vshrl.u32 %v1478, 7
        %v1480 = vsub.s32 %v1477, %v1479
        %v1481 = vrot.slane %v1459, %v1480
        %v1483 = vunpack.c.l.s4 1966171168
        %v1484 = vunpack.c.0.s8 %v1483
        %v1485 = vlaneseq
        %v1486 = vshrl.u32 %v1485, 7
        %v1487 = vsub.s32 %v1484, %v1486
        %v1488 = vrot.slane %v1460, %v1487
        %v1489 = vcombine.low %v1467, %v1474
        %v1490 = vcombine.low %v1481, %v1488
        %v1492 = vunpack.c.l.s4 1966171168
        %v1493 = vunpack.c.0.s8 %v1492
        %v1494 = vlaneseq
        %v1495 = vshrl.u32 %v1494, 7
        %v1496 = vsub.s32 %v1493, %v1495
        %v1497 = vrot.slane %v1489, %v1496
        %v1499 = vunpack.c.l.s4 1966171168
        %v1500 = vunpack.c.0.s8 %v1499
        %v1501 = vlaneseq
        %v1502 = vshrl.u32 %v1501, 7
        %v1503 = vsub.s32 %v1500, %v1502
        %v1504 = vrot.slane %v1490, %v1503
        %v1505 = vcombine.low %v1497, %v1504
        %v1506 = vcombine.low %v980, %v984
        %v1507 = vcombine.low %v988, %v992
        %v1508 = vcombine.low %v996, %v1000
        %v1509 = vcombine.low %v1004, %v1008
        %v1511 = vunpack.c.l.s4 1966171168
        %v1512 = vunpack.c.0.s8 %v1511
        %v1513 = vlaneseq
        %v1514 = vshrl.u32 %v1513, 7
        %v1515 = vsub.s32 %v1512, %v1514
        %v1516 = vrot.slane %v1506, %v1515
        %v1518 = vunpack.c.l.s4 1966171168
        %v1519 = vunpack.c.0.s8 %v1518
        %v1520 = vlaneseq
        %v1521 = vshrl.u32 %v1520, 7
        %v1522 = vsub.s32 %v1519, %v1521
        %v1523 = vrot.slane %v1507, %v1522
        %v1525 = vunpack.c.l.s4 1966171168
        %v1526 = vunpack.c.0.s8 %v1525
        %v1527 = vlaneseq
        %v1528 = vshrl.u32 %v1527, 7
        %v1529 = vsub.s32 %v1526, %v1528
        %v1530 = vrot.slane %v1508, %v1529
        %v1532 = vunpack.c.l.s4 1966171168
        %v1533 = vunpack.c.0.s8 %v1532
        %v1534 = vlaneseq
        %v1535 = vshrl.u32 %v1534, 7
        %v1536 = vsub.s32 %v1533, %v1535
        %v1537 = vrot.slane %v1509, %v1536
        %v1538 = vcombine.low %v1516, %v1523
        %v1539 = vcombine.low %v1530, %v1537
        %v1541 = vunpack.c.l.s4 1966171168
        %v1542 = vunpack.c.0.s8 %v1541
        %v1543 = vlaneseq
        %v1544 = vshrl.u32 %v1543, 7
        %v1545 = vsub.s32 %v1542, %v1544
        %v1546 = vrot.slane %v1538, %v1545
        %v1548 = vunpack.c.l.s4 1966171168
        %v1549 = vunpack.c.0.s8 %v1548
        %v1550 = vlaneseq
        %v1551 = vshrl.u32 %v1550, 7
        %v1552 = vsub.s32 %v1549, %v1551
        %v1553 = vrot.slane %v1539, %v1552
        %v1554 = vcombine.low %v1546, %v1553
        %v1555 = vcombine.low %v1012, %v1016
        %v1556 = vcombine.low %v1020, %v1024
        %v1557 = vcombine.low %v1028, %v1032
        %v1558 = vcombine.low %v1036, %v1040
        %v1560 = vunpack.c.l.s4 1966171168
        %v1561 = vunpack.c.0.s8 %v1560
        %v1562 = vlaneseq
        %v1563 = vshrl.u32 %v1562, 7
        %v1564 = vsub.s32 %v1561, %v1563
        %v1565 = vrot.slane %v1555, %v1564
        %v1567 = vunpack.c.l.s4 1966171168
        %v1568 = vunpack.c.0.s8 %v1567
        %v1569 = vlaneseq
        %v1570 = vshrl.u32 %v1569, 7
        %v1571 = vsub.s32 %v1568, %v1570
        %v1572 = vrot.slane %v1556, %v1571
        %v1574 = vunpack.c.l.s4 1966171168
        %v1575 = vunpack.c.0.s8 %v1574
        %v1576 = vlaneseq
        %v1577 = vshrl.u32 %v1576, 7
        %v1578 = vsub.s32 %v1575, %v1577
        %v1579 = vrot.slane %v1557, %v1578
        %v1581 = vunpack.c.l.s4 1966171168
        %v1582 = vunpack.c.0.s8 %v1581
        %v1583 = vlaneseq
        %v1584 = vshrl.u32 %v1583, 7
        %v1585 = vsub.s32 %v1582, %v1584
        %v1586 = vrot.slane %v1558, %v1585
        %v1587 = vcombine.low %v1565, %v1572
        %v1588 = vcombine.low %v1579, %v1586
        %v1590 = vunpack.c.l.s4 1966171168
        %v1591 = vunpack.c.0.s8 %v1590
        %v1592 = vlaneseq
        %v1593 = vshrl.u32 %v1592, 7
        %v1594 = vsub.s32 %v1591, %v1593
        %v1595 = vrot.slane %v1587, %v1594
        %v1597 = vunpack.c.l.s4 1966171168
        %v1598 = vunpack.c.0.s8 %v1597
        %v1599 = vlaneseq
        %v1600 = vshrl.u32 %v1599, 7
        %v1601 = vsub.s32 %v1598, %v1600
        %v1602 = vrot.slane %v1588, %v1601
        %v1603 = vcombine.low %v1595, %v1602
        %v1604 = vcombine.low %v1044, %v1048
        %v1605 = vcombine.low %v1052, %v1056
        %v1606 = vcombine.low %v1060, %v1064
        %v1607 = vcombine.low %v1068, %v1072
        %v1609 = vunpack.c.l.s4 1966171168
        %v1610 = vunpack.c.0.s8 %v1609
        %v1611 = vlaneseq
        %v1612 = vshrl.u32 %v1611, 7
        %v1613 = vsub.s32 %v1610, %v1612
        %v1614 = vrot.slane %v1604, %v1613
        %v1616 = vunpack.c.l.s4 1966171168
        %v1617 = vunpack.c.0.s8 %v1616
        %v1618 = vlaneseq
        %v1619 = vshrl.u32 %v1618, 7
        %v1620 = vsub.s32 %v1617, %v1619
        %v1621 = vrot.slane %v1605, %v1620
        %v1623 = vunpack.c.l.s4 1966171168
        %v1624 = vunpack.c.0.s8 %v1623
        %v1625 = vlaneseq
        %v1626 = vshrl.u32 %v1625, 7
        %v1627 = vsub.s32 %v1624, %v1626
        %v1628 = vrot.slane %v1606, %v1627
        %v1630 = vunpack.c.l.s4 1966171168
        %v1631 = vunpack.c.0.s8 %v1630
        %v1632 = vlaneseq
        %v1633 = vshrl.u32 %v1632, 7
        %v1634 = vsub.s32 %v1631, %v1633
        %v1635 = vrot.slane %v1607, %v1634
        %v1636 = vcombine.low %v1614, %v1621
        %v1637 = vcombine.low %v1628, %v1635
        %v1639 = vunpack.c.l.s4 1966171168
        %v1640 = vunpack.c.0.s8 %v1639
        %v1641 = vlaneseq
        %v1642 = vshrl.u32 %v1641, 7
        %v1643 = vsub.s32 %v1640, %v1642
        %v1644 = vrot.slane %v1636, %v1643
        %v1646 = vunpack.c.l.s4 1966171168
        %v1647 = vunpack.c.0.s8 %v1646
        %v1648 = vlaneseq
        %v1649 = vshrl.u32 %v1648, 7
        %v1650 = vsub.s32 %v1647, %v1649
        %v1651 = vrot.slane %v1637, %v1650
        %v1652 = vcombine.low %v1644, %v1651
        %v1653 = vcombine.low %v1076, %v1080
        %v1654 = vcombine.low %v1084, %v1088
        %v1655 = vcombine.low %v1092, %v1096
        %v1656 = vcombine.low %v1100, %v1104
        %v1658 = vunpack.c.l.s4 1966171168
        %v1659 = vunpack.c.0.s8 %v1658
        %v1660 = vlaneseq
        %v1661 = vshrl.u32 %v1660, 7
        %v1662 = vsub.s32 %v1659, %v1661
        %v1663 = vrot.slane %v1653, %v1662
        %v1665 = vunpack.c.l.s4 1966171168
        %v1666 = vunpack.c.0.s8 %v1665
        %v1667 = vlaneseq
        %v1668 = vshrl.u32 %v1667, 7
        %v1669 = vsub.s32 %v1666, %v1668
        %v1670 = vrot.slane %v1654, %v1669
        %v1672 = vunpack.c.l.s4 1966171168
        %v1673 = vunpack.c.0.s8 %v1672
        %v1674 = vlaneseq
        %v1675 = vshrl.u32 %v1674, 7
        %v1676 = vsub.s32 %v1673, %v1675
        %v1677 = vrot.slane %v1655, %v1676
        %v1679 = vunpack.c.l.s4 1966171168
        %v1680 = vunpack.c.0.s8 %v1679
        %v1681 = vlaneseq
        %v1682 = vshrl.u32 %v1681, 7
        %v1683 = vsub.s32 %v1680, %v1682
        %v1684 = vrot.slane %v1656, %v1683
        %v1685 = vcombine.low %v1663, %v1670
        %v1686 = vcombine.low %v1677, %v1684
        %v1688 = vunpack.c.l.s4 1966171168
        %v1689 = vunpack.c.0.s8 %v1688
        %v1690 = vlaneseq
        %v1691 = vshrl.u32 %v1690, 7
        %v1692 = vsub.s32 %v1689, %v1691
        %v1693 = vrot.slane %v1685, %v1692
        %v1695 = vunpack.c.l.s4 1966171168
        %v1696 = vunpack.c.0.s8 %v1695
        %v1697 = vlaneseq
        %v1698 = vshrl.u32 %v1697, 7
        %v1699 = vsub.s32 %v1696, %v1698
        %v1700 = vrot.slane %v1686, %v1699
        %v1701 = vcombine.low %v1693, %v1700
        %v1702 = vcombine.low %v1108, %v1112
        %v1703 = vcombine.low %v1116, %v1120
        %v1704 = vcombine.low %v1124, %v1128
        %v1705 = vcombine.low %v1132, %v1136
        %v1707 = vunpack.c.l.s4 1966171168
        %v1708 = vunpack.c.0.s8 %v1707
        %v1709 = vlaneseq
        %v1710 = vshrl.u32 %v1709, 7
        %v1711 = vsub.s32 %v1708, %v1710
        %v1712 = vrot.slane %v1702, %v1711
        %v1714 = vunpack.c.l.s4 1966171168
        %v1715 = vunpack.c.0.s8 %v1714
        %v1716 = vlaneseq
        %v1717 = vshrl.u32 %v1716, 7
        %v1718 = vsub.s32 %v1715, %v1717
        %v1719 = vrot.slane %v1703, %v1718
        %v1721 = vunpack.c.l.s4 1966171168
        %v1722 = vunpack.c.0.s8 %v1721
        %v1723 = vlaneseq
        %v1724 = vshrl.u32 %v1723, 7
        %v1725 = vsub.s32 %v1722, %v1724
        %v1726 = vrot.slane %v1704, %v1725
        %v1728 = vunpack.c.l.s4 1966171168
        %v1729 = vunpack.c.0.s8 %v1728
        %v1730 = vlaneseq
        %v1731 = vshrl.u32 %v1730, 7
        %v1732 = vsub.s32 %v1729, %v1731
        %v1733 = vrot.slane %v1705, %v1732
        %v1734 = vcombine.low %v1712, %v1719
        %v1735 = vcombine.low %v1726, %v1733
        %v1737 = vunpack.c.l.s4 1966171168
        %v1738 = vunpack.c.0.s8 %v1737
        %v1739 = vlaneseq
        %v1740 = vshrl.u32 %v1739, 7
        %v1741 = vsub.s32 %v1738, %v1740
        %v1742 = vrot.slane %v1734, %v1741
        %v1744 = vunpack.c.l.s4 1966171168
        %v1745 = vunpack.c.0.s8 %v1744
        %v1746 = vlaneseq
        %v1747 = vshrl.u32 %v1746, 7
        %v1748 = vsub.s32 %v1745, %v1747
        %v1749 = vrot.slane %v1735, %v1748
        %v1750 = vcombine.low %v1742, %v1749
        %v1751 = vcombine.low %v1140, %v1144
        %v1752 = vcombine.low %v1148, %v1152
        %v1753 = vcombine.low %v1156, %v1160
        %v1754 = vcombine.low %v1164, %v1168
        %v1756 = vunpack.c.l.s4 1966171168
        %v1757 = vunpack.c.0.s8 %v1756
        %v1758 = vlaneseq
        %v1759 = vshrl.u32 %v1758, 7
        %v1760 = vsub.s32 %v1757, %v1759
        %v1761 = vrot.slane %v1751, %v1760
        %v1763 = vunpack.c.l.s4 1966171168
        %v1764 = vunpack.c.0.s8 %v1763
        %v1765 = vlaneseq
        %v1766 = vshrl.u32 %v1765, 7
        %v1767 = vsub.s32 %v1764, %v1766
        %v1768 = vrot.slane %v1752, %v1767
        %v1770 = vunpack.c.l.s4 1966171168
        %v1771 = vunpack.c.0.s8 %v1770
        %v1772 = vlaneseq
        %v1773 = vshrl.u32 %v1772, 7
        %v1774 = vsub.s32 %v1771, %v1773
        %v1775 = vrot.slane %v1753, %v1774
        %v1777 = vunpack.c.l.s4 1966171168
        %v1778 = vunpack.c.0.s8 %v1777
        %v1779 = vlaneseq
        %v1780 = vshrl.u32 %v1779, 7
        %v1781 = vsub.s32 %v1778, %v1780
        %v1782 = vrot.slane %v1754, %v1781
        %v1783 = vcombine.low %v1761, %v1768
        %v1784 = vcombine.low %v1775, %v1782
        %v1786 = vunpack.c.l.s4 1966171168
        %v1787 = vunpack.c.0.s8 %v1786
        %v1788 = vlaneseq
        %v1789 = vshrl.u32 %v1788, 7
        %v1790 = vsub.s32 %v1787, %v1789
        %v1791 = vrot.slane %v1783, %v1790
        %v1793 = vunpack.c.l.s4 1966171168
        %v1794 = vunpack.c.0.s8 %v1793
        %v1795 = vlaneseq
        %v1796 = vshrl.u32 %v1795, 7
        %v1797 = vsub.s32 %v1794, %v1796
        %v1798 = vrot.slane %v1784, %v1797
        %v1799 = vcombine.low %v1791, %v1798
        %v1800 = vcombine.low %v1172, %v1176
        %v1801 = vcombine.low %v1180, %v1184
        %v1802 = vcombine.low %v1188, %v1192
        %v1803 = vcombine.low %v1196, %v1200
        %v1805 = vunpack.c.l.s4 1966171168
        %v1806 = vunpack.c.0.s8 %v1805
        %v1807 = vlaneseq
        %v1808 = vshrl.u32 %v1807, 7
        %v1809 = vsub.s32 %v1806, %v1808
        %v1810 = vrot.slane %v1800, %v1809
        %v1812 = vunpack.c.l.s4 1966171168
        %v1813 = vunpack.c.0.s8 %v1812
        %v1814 = vlaneseq
        %v1815 = vshrl.u32 %v1814, 7
        %v1816 = vsub.s32 %v1813, %v1815
        %v1817 = vrot.slane %v1801, %v1816
        %v1819 = vunpack.c.l.s4 1966171168
        %v1820 = vunpack.c.0.s8 %v1819
        %v1821 = vlaneseq
        %v1822 = vshrl.u32 %v1821, 7
        %v1823 = vsub.s32 %v1820, %v1822
        %v1824 = vrot.slane %v1802, %v1823
        %v1826 = vunpack.c.l.s4 1966171168
        %v1827 = vunpack.c.0.s8 %v1826
        %v1828 = vlaneseq
        %v1829 = vshrl.u32 %v1828, 7
        %v1830 = vsub.s32 %v1827, %v1829
        %v1831 = vrot.slane %v1803, %v1830
        %v1832 = vcombine.low %v1810, %v1817
        %v1833 = vcombine.low %v1824, %v1831
        %v1835 = vunpack.c.l.s4 1966171168
        %v1836 = vunpack.c.0.s8 %v1835
        %v1837 = vlaneseq
        %v1838 = vshrl.u32 %v1837, 7
        %v1839 = vsub.s32 %v1836, %v1838
        %v1840 = vrot.slane %v1832, %v1839
        %v1842 = vunpack.c.l.s4 1966171168
        %v1843 = vunpack.c.0.s8 %v1842
        %v1844 = vlaneseq
        %v1845 = vshrl.u32 %v1844, 7
        %v1846 = vsub.s32 %v1843, %v1845
        %v1847 = vrot.slane %v1833, %v1846
        %v1848 = vcombine.low %v1840, %v1847
        %v1849 = vcombine.low %v1204, %v1208
        %v1850 = vcombine.low %v1212, %v1216
        %v1851 = vcombine.low %v1220, %v1224
        %v1852 = vcombine.low %v1228, %v1232
        %v1854 = vunpack.c.l.s4 1966171168
        %v1855 = vunpack.c.0.s8 %v1854
        %v1856 = vlaneseq
        %v1857 = vshrl.u32 %v1856, 7
        %v1858 = vsub.s32 %v1855, %v1857
        %v1859 = vrot.slane %v1849, %v1858
        %v1861 = vunpack.c.l.s4 1966171168
        %v1862 = vunpack.c.0.s8 %v1861
        %v1863 = vlaneseq
        %v1864 = vshrl.u32 %v1863, 7
        %v1865 = vsub.s32 %v1862, %v1864
        %v1866 = vrot.slane %v1850, %v1865
        %v1868 = vunpack.c.l.s4 1966171168
        %v1869 = vunpack.c.0.s8 %v1868
        %v1870 = vlaneseq
        %v1871 = vshrl.u32 %v1870, 7
        %v1872 = vsub.s32 %v1869, %v1871
        %v1873 = vrot.slane %v1851, %v1872
        %v1875 = vunpack.c.l.s4 1966171168
        %v1876 = vunpack.c.0.s8 %v1875
        %v1877 = vlaneseq
        %v1878 = vshrl.u32 %v1877, 7
        %v1879 = vsub.s32 %v1876, %v1878
        %v1880 = vrot.slane %v1852, %v1879
        %v1881 = vcombine.low %v1859, %v1866
        %v1882 = vcombine.low %v1873, %v1880
        %v1884 = vunpack.c.l.s4 1966171168
        %v1885 = vunpack.c.0.s8 %v1884
        %v1886 = vlaneseq
        %v1887 = vshrl.u32 %v1886, 7
        %v1888 = vsub.s32 %v1885, %v1887
        %v1889 = vrot.slane %v1881, %v1888
        %v1891 = vunpack.c.l.s4 1966171168
        %v1892 = vunpack.c.0.s8 %v1891
        %v1893 = vlaneseq
        %v1894 = vshrl.u32 %v1893, 7
        %v1895 = vsub.s32 %v1892, %v1894
        %v1896 = vrot.slane %v1882, %v1895
        %v1897 = vcombine.low %v1889, %v1896
        %v1898 = vcombine.low %v1236, %v1240
        %v1899 = vcombine.low %v1244, %v1248
        %v1900 = vcombine.low %v1252, %v1256
        %v1901 = vcombine.low %v1260, %v1264
        %v1903 = vunpack.c.l.s4 1966171168
        %v1904 = vunpack.c.0.s8 %v1903
        %v1905 = vlaneseq
        %v1906 = vshrl.u32 %v1905, 7
        %v1907 = vsub.s32 %v1904, %v1906
        %v1908 = vrot.slane %v1898, %v1907
        %v1910 = vunpack.c.l.s4 1966171168
        %v1911 = vunpack.c.0.s8 %v1910
        %v1912 = vlaneseq
        %v1913 = vshrl.u32 %v1912, 7
        %v1914 = vsub.s32 %v1911, %v1913
        %v1915 = vrot.slane %v1899, %v1914
        %v1917 = vunpack.c.l.s4 1966171168
        %v1918 = vunpack.c.0.s8 %v1917
        %v1919 = vlaneseq
        %v1920 = vshrl.u32 %v1919, 7
        %v1921 = vsub.s32 %v1918, %v1920
        %v1922 = vrot.slane %v1900, %v1921
        %v1924 = vunpack.c.l.s4 1966171168
        %v1925 = vunpack.c.0.s8 %v1924
        %v1926 = vlaneseq
        %v1927 = vshrl.u32 %v1926, 7
        %v1928 = vsub.s32 %v1925, %v1927
        %v1929 = vrot.slane %v1901, %v1928
        %v1930 = vcombine.low %v1908, %v1915
        %v1931 = vcombine.low %v1922, %v1929
        %v1933 = vunpack.c.l.s4 1966171168
        %v1934 = vunpack.c.0.s8 %v1933
        %v1935 = vlaneseq
        %v1936 = vshrl.u32 %v1935, 7
        %v1937 = vsub.s32 %v1934, %v1936
        %v1938 = vrot.slane %v1930, %v1937
        %v1940 = vunpack.c.l.s4 1966171168
        %v1941 = vunpack.c.0.s8 %v1940
        %v1942 = vlaneseq
        %v1943 = vshrl.u32 %v1942, 7
        %v1944 = vsub.s32 %v1941, %v1943
        %v1945 = vrot.slane %v1931, %v1944
        %v1946 = vcombine.low %v1938, %v1945
        %v1947 = vcombine.low %v1268, %v1272
        %v1948 = vcombine.low %v1276, %v1280
        %v1949 = vcombine.low %v1284, %v1288
        %v1950 = vcombine.low %v1292, %v1296
        %v1952 = vunpack.c.l.s4 1966171168
        %v1953 = vunpack.c.0.s8 %v1952
        %v1954 = vlaneseq
        %v1955 = vshrl.u32 %v1954, 7
        %v1956 = vsub.s32 %v1953, %v1955
        %v1957 = vrot.slane %v1947, %v1956
        %v1959 = vunpack.c.l.s4 1966171168
        %v1960 = vunpack.c.0.s8 %v1959
        %v1961 = vlaneseq
        %v1962 = vshrl.u32 %v1961, 7
        %v1963 = vsub.s32 %v1960, %v1962
        %v1964 = vrot.slane %v1948, %v1963
        %v1966 = vunpack.c.l.s4 1966171168
        %v1967 = vunpack.c.0.s8 %v1966
        %v1968 = vlaneseq
        %v1969 = vshrl.u32 %v1968, 7
        %v1970 = vsub.s32 %v1967, %v1969
        %v1971 = vrot.slane %v1949, %v1970
        %v1973 = vunpack.c.l.s4 1966171168
        %v1974 = vunpack.c.0.s8 %v1973
        %v1975 = vlaneseq
        %v1976 = vshrl.u32 %v1975, 7
        %v1977 = vsub.s32 %v1974, %v1976
        %v1978 = vrot.slane %v1950, %v1977
        %v1979 = vcombine.low %v1957, %v1964
        %v1980 = vcombine.low %v1971, %v1978
        %v1982 = vunpack.c.l.s4 1966171168
        %v1983 = vunpack.c.0.s8 %v1982
        %v1984 = vlaneseq
        %v1985 = vshrl.u32 %v1984, 7
        %v1986 = vsub.s32 %v1983, %v1985
        %v1987 = vrot.slane %v1979, %v1986
        %v1989 = vunpack.c.l.s4 1966171168
        %v1990 = vunpack.c.0.s8 %v1989
        %v1991 = vlaneseq
        %v1992 = vshrl.u32 %v1991, 7
        %v1993 = vsub.s32 %v1990, %v1992
        %v1994 = vrot.slane %v1980, %v1993
        %v1995 = vcombine.low %v1987, %v1994
        %v1996 = vcombine.low %v1300, %v1304
        %v1997 = vcombine.low %v1308, %v1312
        %v1998 = vcombine.low %v1316, %v1320
        %v1999 = vcombine.low %v1324, %v1328
        %v2001 = vunpack.c.l.s4 1966171168
        %v2002 = vunpack.c.0.s8 %v2001
        %v2003 = vlaneseq
        %v2004 = vshrl.u32 %v2003, 7
        %v2005 = vsub.s32 %v2002, %v2004
        %v2006 = vrot.slane %v1996, %v2005
        %v2008 = vunpack.c.l.s4 1966171168
        %v2009 = vunpack.c.0.s8 %v2008
        %v2010 = vlaneseq
        %v2011 = vshrl.u32 %v2010, 7
        %v2012 = vsub.s32 %v2009, %v2011
        %v2013 = vrot.slane %v1997, %v2012
        %v2015 = vunpack.c.l.s4 1966171168
        %v2016 = vunpack.c.0.s8 %v2015
        %v2017 = vlaneseq
        %v2018 = vshrl.u32 %v2017, 7
        %v2019 = vsub.s32 %v2016, %v2018
        %v2020 = vrot.slane %v1998, %v2019
        %v2022 = vunpack.c.l.s4 1966171168
        %v2023 = vunpack.c.0.s8 %v2022
        %v2024 = vlaneseq
        %v2025 = vshrl.u32 %v2024, 7
        %v2026 = vsub.s32 %v2023, %v2025
        %v2027 = vrot.slane %v1999, %v2026
        %v2028 = vcombine.low %v2006, %v2013
        %v2029 = vcombine.low %v2020, %v2027
        %v2031 = vunpack.c.l.s4 1966171168
        %v2032 = vunpack.c.0.s8 %v2031
        %v2033 = vlaneseq
        %v2034 = vshrl.u32 %v2033, 7
        %v2035 = vsub.s32 %v2032, %v2034
        %v2036 = vrot.slane %v2028, %v2035
        %v2038 = vunpack.c.l.s4 1966171168
        %v2039 = vunpack.c.0.s8 %v2038
        %v2040 = vlaneseq
        %v2041 = vshrl.u32 %v2040, 7
        %v2042 = vsub.s32 %v2039, %v2041
        %v2043 = vrot.slane %v2029, %v2042
        %v2044 = vcombine.low %v2036, %v2043
        %v2045 = vcombine.low %v1332, %v1336
        %v2046 = vcombine.low %v1340, %v1344
        %v2047 = vcombine.low %v1348, %v1352
        %v2048 = vcombine.low %v1356, %v1360
        %v2050 = vunpack.c.l.s4 1966171168
        %v2051 = vunpack.c.0.s8 %v2050
        %v2052 = vlaneseq
        %v2053 = vshrl.u32 %v2052, 7
        %v2054 = vsub.s32 %v2051, %v2053
        %v2055 = vrot.slane %v2045, %v2054
        %v2057 = vunpack.c.l.s4 1966171168
        %v2058 = vunpack.c.0.s8 %v2057
        %v2059 = vlaneseq
        %v2060 = vshrl.u32 %v2059, 7
        %v2061 = vsub.s32 %v2058, %v2060
        %v2062 = vrot.slane %v2046, %v2061
        %v2064 = vunpack.c.l.s4 1966171168
        %v2065 = vunpack.c.0.s8 %v2064
        %v2066 = vlaneseq
        %v2067 = vshrl.u32 %v2066, 7
        %v2068 = vsub.s32 %v2065, %v2067
        %v2069 = vrot.slane %v2047, %v2068
        %v2071 = vunpack.c.l.s4 1966171168
        %v2072 = vunpack.c.0.s8 %v2071
        %v2073 = vlaneseq
        %v2074 = vshrl.u32 %v2073, 7
        %v2075 = vsub.s32 %v2072, %v2074
        %v2076 = vrot.slane %v2048, %v2075
        %v2077 = vcombine.low %v2055, %v2062
        %v2078 = vcombine.low %v2069, %v2076
        %v2080 = vunpack.c.l.s4 1966171168
        %v2081 = vunpack.c.0.s8 %v2080
        %v2082 = vlaneseq
        %v2083 = vshrl.u32 %v2082, 7
        %v2084 = vsub.s32 %v2081, %v2083
        %v2085 = vrot.slane %v2077, %v2084
        %v2087 = vunpack.c.l.s4 1966171168
        %v2088 = vunpack.c.0.s8 %v2087
        %v2089 = vlaneseq
        %v2090 = vshrl.u32 %v2089, 7
        %v2091 = vsub.s32 %v2088, %v2090
        %v2092 = vrot.slane %v2078, %v2091
        %v2093 = vcombine.low %v2085, %v2092
        %v2094 = vcombine.low %v1364, %v1368
        %v2095 = vcombine.low %v1372, %v1376
        %v2096 = vcombine.low %v1380, %v1384
        %v2097 = vcombine.low %v1388, %v1392
        %v2099 = vunpack.c.l.s4 1966171168
        %v2100 = vunpack.c.0.s8 %v2099
        %v2101 = vlaneseq
        %v2102 = vshrl.u32 %v2101, 7
        %v2103 = vsub.s32 %v2100, %v2102
        %v2104 = vrot.slane %v2094, %v2103
        %v2106 = vunpack.c.l.s4 1966171168
        %v2107 = vunpack.c.0.s8 %v2106
        %v2108 = vlaneseq
        %v2109 = vshrl.u32 %v2108, 7
        %v2110 = vsub.s32 %v2107, %v2109
        %v2111 = vrot.slane %v2095, %v2110
        %v2113 = vunpack.c.l.s4 1966171168
        %v2114 = vunpack.c.0.s8 %v2113
        %v2115 = vlaneseq
        %v2116 = vshrl.u32 %v2115, 7
        %v2117 = vsub.s32 %v2114, %v2116
        %v2118 = vrot.slane %v2096, %v2117
        %v2120 = vunpack.c.l.s4 1966171168
        %v2121 = vunpack.c.0.s8 %v2120
        %v2122 = vlaneseq
        %v2123 = vshrl.u32 %v2122, 7
        %v2124 = vsub.s32 %v2121, %v2123
        %v2125 = vrot.slane %v2097, %v2124
        %v2126 = vcombine.low %v2104, %v2111
        %v2127 = vcombine.low %v2118, %v2125
        %v2129 = vunpack.c.l.s4 1966171168
        %v2130 = vunpack.c.0.s8 %v2129
        %v2131 = vlaneseq
        %v2132 = vshrl.u32 %v2131, 7
        %v2133 = vsub.s32 %v2130, %v2132
        %v2134 = vrot.slane %v2126, %v2133
        %v2136 = vunpack.c.l.s4 1966171168
        %v2137 = vunpack.c.0.s8 %v2136
        %v2138 = vlaneseq
        %v2139 = vshrl.u32 %v2138, 7
        %v2140 = vsub.s32 %v2137, %v2139
        %v2141 = vrot.slane %v2127, %v2140
        %v2142 = vcombine.low %v2134, %v2141
        %v2143 = vcombine.low %v1396, %v1400
        %v2144 = vcombine.low %v1404, %v1408
        %v2145 = vcombine.low %v1412, %v1416
        %v2146 = vcombine.low %v1420, %v1424
        %v2148 = vunpack.c.l.s4 1966171168
        %v2149 = vunpack.c.0.s8 %v2148
        %v2150 = vlaneseq
        %v2151 = vshrl.u32 %v2150, 7
        %v2152 = vsub.s32 %v2149, %v2151
        %v2153 = vrot.slane %v2143, %v2152
        %v2155 = vunpack.c.l.s4 1966171168
        %v2156 = vunpack.c.0.s8 %v2155
        %v2157 = vlaneseq
        %v2158 = vshrl.u32 %v2157, 7
        %v2159 = vsub.s32 %v2156, %v2158
        %v2160 = vrot.slane %v2144, %v2159
        %v2162 = vunpack.c.l.s4 1966171168
        %v2163 = vunpack.c.0.s8 %v2162
        %v2164 = vlaneseq
        %v2165 = vshrl.u32 %v2164, 7
        %v2166 = vsub.s32 %v2163, %v2165
        %v2167 = vrot.slane %v2145, %v2166
        %v2169 = vunpack.c.l.s4 1966171168
        %v2170 = vunpack.c.0.s8 %v2169
        %v2171 = vlaneseq
        %v2172 = vshrl.u32 %v2171, 7
        %v2173 = vsub.s32 %v2170, %v2172
        %v2174 = vrot.slane %v2146, %v2173
        %v2175 = vcombine.low %v2153, %v2160
        %v2176 = vcombine.low %v2167, %v2174
        %v2178 = vunpack.c.l.s4 1966171168
        %v2179 = vunpack.c.0.s8 %v2178
        %v2180 = vlaneseq
        %v2181 = vshrl.u32 %v2180, 7
        %v2182 = vsub.s32 %v2179, %v2181
        %v2183 = vrot.slane %v2175, %v2182
        %v2185 = vunpack.c.l.s4 1966171168
        %v2186 = vunpack.c.0.s8 %v2185
        %v2187 = vlaneseq
        %v2188 = vshrl.u32 %v2187, 7
        %v2189 = vsub.s32 %v2186, %v2188
        %v2190 = vrot.slane %v2176, %v2189
        %v2191 = vcombine.low %v2183, %v2190
        %v2192 = vcombine.low %v1428, %v1432
        %v2193 = vcombine.low %v1436, %v1440
        %v2194 = vcombine.low %v1444, %v1448
        %v2195 = vcombine.low %v1452, %v1456
        %v2197 = vunpack.c.l.s4 1966171168
        %v2198 = vunpack.c.0.s8 %v2197
        %v2199 = vlaneseq
        %v2200 = vshrl.u32 %v2199, 7
        %v2201 = vsub.s32 %v2198, %v2200
        %v2202 = vrot.slane %v2192, %v2201
        %v2204 = vunpack.c.l.s4 1966171168
        %v2205 = vunpack.c.0.s8 %v2204
        %v2206 = vlaneseq
        %v2207 = vshrl.u32 %v2206, 7
        %v2208 = vsub.s32 %v2205, %v2207
        %v2209 = vrot.slane %v2193, %v2208
        %v2211 = vunpack.c.l.s4 1966171168
        %v2212 = vunpack.c.0.s8 %v2211
        %v2213 = vlaneseq
        %v2214 = vshrl.u32 %v2213, 7
        %v2215 = vsub.s32 %v2212, %v2214
        %v2216 = vrot.slane %v2194, %v2215
        %v2218 = vunpack.c.l.s4 1966171168
        %v2219 = vunpack.c.0.s8 %v2218
        %v2220 = vlaneseq
        %v2221 = vshrl.u32 %v2220, 7
        %v2222 = vsub.s32 %v2219, %v2221
        %v2223 = vrot.slane %v2195, %v2222
        %v2224 = vcombine.low %v2202, %v2209
        %v2225 = vcombine.low %v2216, %v2223
        %v2227 = vunpack.c.l.s4 1966171168
        %v2228 = vunpack.c.0.s8 %v2227
        %v2229 = vlaneseq
        %v2230 = vshrl.u32 %v2229, 7
        %v2231 = vsub.s32 %v2228, %v2230
        %v2232 = vrot.slane %v2224, %v2231
        %v2234 = vunpack.c.l.s4 1966171168
        %v2235 = vunpack.c.0.s8 %v2234
        %v2236 = vlaneseq
        %v2237 = vshrl.u32 %v2236, 7
        %v2238 = vsub.s32 %v2235, %v2237
        %v2239 = vrot.slane %v2225, %v2238
        %v2240 = vcombine.low %v2232, %v2239
        %2241 = vset.pattern.permute.xlu0 0
        %2242 = vperm.xlu0 %2241, %v1505
        %v2243 = vpop.permute.xlu0 %2242
        %2244 = vset.pattern.permute.xlu0 0
        %2245 = vperm.xlu0 %2244, %v1554
        %v2246 = vpop.permute.xlu0 %2245
        %2247 = vset.pattern.permute.xlu0 0
        %2248 = vperm.xlu0 %2247, %v1603
        %v2249 = vpop.permute.xlu0 %2248
        %2250 = vset.pattern.permute.xlu0 0
        %2251 = vperm.xlu0 %2250, %v1652
        %v2252 = vpop.permute.xlu0 %2251
        %2253 = vset.pattern.permute.xlu0 0
        %2254 = vperm.xlu0 %2253, %v1701
        %v2255 = vpop.permute.xlu0 %2254
        %2256 = vset.pattern.permute.xlu0 0
        %2257 = vperm.xlu0 %2256, %v1750
        %v2258 = vpop.permute.xlu0 %2257
        %2259 = vset.pattern.permute.xlu0 0
        %2260 = vperm.xlu0 %2259, %v1799
        %v2261 = vpop.permute.xlu0 %2260
        %2262 = vset.pattern.permute.xlu0 0
        %2263 = vperm.xlu0 %2262, %v1848
        %v2264 = vpop.permute.xlu0 %2263
        %2265 = vset.pattern.permute.xlu0 0
        %2266 = vperm.xlu0 %2265, %v1897
        %v2267 = vpop.permute.xlu0 %2266
        %2268 = vset.pattern.permute.xlu0 0
        %2269 = vperm.xlu0 %2268, %v1946
        %v2270 = vpop.permute.xlu0 %2269
        %2271 = vset.pattern.permute.xlu0 0
        %2272 = vperm.xlu0 %2271, %v1995
        %v2273 = vpop.permute.xlu0 %2272
        %2274 = vset.pattern.permute.xlu0 0
        %2275 = vperm.xlu0 %2274, %v2044
        %v2276 = vpop.permute.xlu0 %2275
        %2277 = vset.pattern.permute.xlu0 0
        %2278 = vperm.xlu0 %2277, %v2093
        %v2279 = vpop.permute.xlu0 %2278
        %2280 = vset.pattern.permute.xlu0 0
        %2281 = vperm.xlu0 %2280, %v2142
        %v2282 = vpop.permute.xlu0 %2281
        %2283 = vset.pattern.permute.xlu0 0
        %2284 = vperm.xlu0 %2283, %v2191
        %v2285 = vpop.permute.xlu0 %2284
        %2286 = vset.pattern.permute.xlu0 0
        %2287 = vperm.xlu0 %2286, %v2240
        %v2288 = vpop.permute.xlu0 %2287
        %v2289 = vlaneseq
        %v2290 = vand.u32 %v2289, 127
        %v2291 = vlaneseq
        %v2292 = vshrl.u32 %v2291, 7
        %v2293 = vsub.s32 %v2290, %v2292
        %v2294 = vrot.slane %v2243, %v2293
        %v2295 = vadd.s32 %v2290, 4294967288
        %v2296 = vlaneseq
        %v2297 = vshrl.u32 %v2296, 7
        %v2298 = vsub.s32 %v2295, %v2297
        %v2299 = vrot.slane %v2246, %v2298
        %vm2300 = vcmask 130112
        %v2301 = vsel %vm2300, %v2299, %v2294
        %v2302 = vadd.s32 %v2290, 4294967280
        %v2303 = vlaneseq
        %v2304 = vshrl.u32 %v2303, 7
        %v2305 = vsub.s32 %v2302, %v2304
        %v2306 = vrot.slane %v2249, %v2305
        %vm2307 = vcmask 195712
        %v2308 = vsel %vm2307, %v2306, %v2301
        %v2309 = vadd.s32 %v2290, 4294967272
        %v2310 = vlaneseq
        %v2311 = vshrl.u32 %v2310, 7
        %v2312 = vsub.s32 %v2309, %v2311
        %v2313 = vrot.slane %v2252, %v2312
        %vm2314 = vcmask 261312
        %v2315 = vsel %vm2314, %v2313, %v2308
        %v2316 = vadd.s32 %v2290, 4294967264
        %v2317 = vlaneseq
        %v2318 = vshrl.u32 %v2317, 7
        %v2319 = vsub.s32 %v2316, %v2318
        %v2320 = vrot.slane %v2255, %v2319
        %vm2321 = vcmask 326912
        %v2322 = vsel %vm2321, %v2320, %v2315
        %v2323 = vadd.s32 %v2290, 4294967256
        %v2324 = vlaneseq
        %v2325 = vshrl.u32 %v2324, 7
        %v2326 = vsub.s32 %v2323, %v2325
        %v2327 = vrot.slane %v2258, %v2326
        %vm2328 = vcmask 392512
        %v2329 = vsel %vm2328, %v2327, %v2322
        %v2330 = vadd.s32 %v2290, 4294967248
        %v2331 = vlaneseq
        %v2332 = vshrl.u32 %v2331, 7
        %v2333 = vsub.s32 %v2330, %v2332
        %v2334 = vrot.slane %v2261, %v2333
        %vm2335 = vcmask 458112
        %v2336 = vsel %vm2335, %v2334, %v2329
        %v2337 = vadd.s32 %v2290, 4294967240
        %v2338 = vlaneseq
        %v2339 = vshrl.u32 %v2338, 7
        %v2340 = vsub.s32 %v2337, %v2339
        %v2341 = vrot.slane %v2264, %v2340
        %vm2342 = vcmask 523712
        %v2343 = vsel %vm2342, %v2341, %v2336
        %v2344 = vadd.s32 %v2290, 4294967232
        %v2345 = vlaneseq
        %v2346 = vshrl.u32 %v2345, 7
        %v2347 = vsub.s32 %v2344, %v2346
        %v2348 = vrot.slane %v2267, %v2347
        %vm2349 = vcmask 589312
        %v2350 = vsel %vm2349, %v2348, %v2343
        %v2351 = vadd.s32 %v2290, 4294967224
        %v2352 = vlaneseq
        %v2353 = vshrl.u32 %v2352, 7
        %v2354 = vsub.s32 %v2351, %v2353
        %v2355 = vrot.slane %v2270, %v2354
        %vm2356 = vcmask 654912
        %v2357 = vsel %vm2356, %v2355, %v2350
        %v2358 = vadd.s32 %v2290, 4294967216
        %v2359 = vlaneseq
        %v2360 = vshrl.u32 %v2359, 7
        %v2361 = vsub.s32 %v2358, %v2360
        %v2362 = vrot.slane %v2273, %v2361
        %vm2363 = vcmask 720512
        %v2364 = vsel %vm2363, %v2362, %v2357
        %v2365 = vadd.s32 %v2290, 4294967208
        %v2366 = vlaneseq
        %v2367 = vshrl.u32 %v2366, 7
        %v2368 = vsub.s32 %v2365, %v2367
        %v2369 = vrot.slane %v2276, %v2368
        %vm2370 = vcmask 786112
        %v2371 = vsel %vm2370, %v2369, %v2364
        %v2372 = vadd.s32 %v2290, 4294967200
        %v2373 = vlaneseq
        %v2374 = vshrl.u32 %v2373, 7
        %v2375 = vsub.s32 %v2372, %v2374
        %v2376 = vrot.slane %v2279, %v2375
        %vm2377 = vcmask 851712
        %v2378 = vsel %vm2377, %v2376, %v2371
        %v2379 = vadd.s32 %v2290, 4294967192
        %v2380 = vlaneseq
        %v2381 = vshrl.u32 %v2380, 7
        %v2382 = vsub.s32 %v2379, %v2381
        %v2383 = vrot.slane %v2282, %v2382
        %vm2384 = vcmask 917312
        %v2385 = vsel %vm2384, %v2383, %v2378
        %v2386 = vadd.s32 %v2290, 4294967184
        %v2387 = vlaneseq
        %v2388 = vshrl.u32 %v2387, 7
        %v2389 = vsub.s32 %v2386, %v2388
        %v2390 = vrot.slane %v2285, %v2389
        %vm2391 = vcmask 982912
        %v2392 = vsel %vm2391, %v2390, %v2385
        %v2393 = vadd.s32 %v2290, 4294967176
        %v2394 = vlaneseq
        %v2395 = vshrl.u32 %v2394, 7
        %v2396 = vsub.s32 %v2393, %v2395
        %v2397 = vrot.slane %v2288, %v2396
        %vm2398 = vcmask 1048512
        %v2399 = vsel %vm2398, %v2397, %v2392
        %v2401 = vunpack.c.l.s4 1966171168
        %v2402 = vunpack.c.0.s8 %v2401
        %v2403 = vlaneseq
        %v2404 = vshrl.u32 %v2403, 7
        %v2405 = vsub.s32 %v2402, %v2404
        %v2406 = vrot.slane %v2399, %v2405
        %v2408 = vunpack.c.l.s4 1966171168
        %v2409 = vunpack.c.0.s8 %v2408
        %v2410 = vlaneseq
        %v2411 = vshrl.u32 %v2410, 7
        %v2412 = vsub.s32 %v2409, %v2411
        %v2413 = vrot.slane %v2406, %v2412
        %v2415 = vmax.f32 %v879, %v2413
        %2416 = vst [vmem:[%s302] sm:$0x1] %v2415
        %s2417 = sand.u32 %s206, 1
        %s2418 = scalar_lea.sflag [#allocation3], %s2417
        %s2419 = sand.u32 %s206, 1
        %s2420 = scalar_lea.vmem [#allocation2], %s2419
        // Predicated region
        $region53: #{tpu_custom_call.1} parent=47 // pred_check
          %p2421 = pneg %p216
        $region54: #{tpu_custom_call.1} parent=47 // pred_check_branch
          %2423 = sbr.rel (%p2421) target = $region56
        $region55: #{tpu_custom_call.1} parent=47 // pred_region
          %s2425 = ssub.s32 16, 16
          %2426 = vsyncadd %s2418, %s2425
          %s2427 = sadd.s32 %s27, %s26
          %s2428 = smul.addr %s2427, 16
          %s2429 = scalar_lea.hbm %s7, %s2428
          %s2431 = sshll.u32 %s2420, 4
          %s2432 = int_to_ptr.vmem [resolvable:$true] %s2431
          %2434 = dma.vmem_to_hbm [thread:$0]  %s2432, 16, %s2429, %s2418
        $region56: #{tpu_custom_call.1} parent=47 // pred_fallthru
          _
      $region48: #{tpu_custom_call.1} parent=5 // pred_fallthru
        _
      %p2435 = scmp.le.s32.totalorder 2, %s16
      // Predicated region
      $region57: #{tpu_custom_call.1} parent=5 // pred_check
        %p2436 = pneg %p2435
      $region58: #{tpu_custom_call.1} parent=5 // pred_check_branch
        %2438 = sbr.rel (%p2436) target = $region60
      $region59: #{tpu_custom_call.1} parent=5 // pred_region
        %s2439 = ssub.s32 %s16, 2
        // Predicated region
        $region61: #{tpu_custom_call.1} parent=59 // pred_check
          %p2440 = pneg %p222
        $region62: #{tpu_custom_call.1} parent=59 // pred_check_branch
          %2442 = sbr.rel (%p2440) target = $region64
        $region63: #{tpu_custom_call.1} parent=59 // pred_region
          %s2443 = sand.u32 %s207, 1
          %s2444 = scalar_lea.sflag [#allocation3], %s2443
          %s2445 = sand.u32 %s207, 1
          %s2446 = scalar_lea.vmem [#allocation2], %s2445
          %2447 = dma.done %s2444, 16
        $region64: #{tpu_custom_call.1} parent=59 // pred_fallthru
          _
      $region60: #{tpu_custom_call.1} parent=5 // pred_fallthru
        _
    $region6: #{tpu_custom_call.1} parent=1 // loop_footer
      %s20 = sadd.s32 1, %s16
    $region7: #{tpu_custom_call.1} parent=1 // loop_footer_branch
      %15 = sbr.rel target = $region3
    $region8: #{tpu_custom_call.1} parent=1 // loop_exit
      _
    %2448 = vsyncpa [#allocation3], 1
    %s2449 = scalar_lea.sflag [#allocation3], 1
    %2450 = vsyncpa %s2449, 1

</llo_original>
